<compile_context>
chip_gen: v6e
topology: v6e:2x2x1
jax: 0.10.0
libtpu: 0.0.40
codegen_flags: <defaults>
</compile_context>

<pallas_src>
import functools
import math

import jax
import jax.numpy as jnp
import numpy as np
from jax.experimental import pallas as pl
from jax.experimental.pallas import tpu as pltpu


# ----- NeRFMLP config (the `params` object handed to the PyTorch module) -----
MAX_FREQ = 3                                   # freqs = 2**[0..3] = [1, 2, 4, 8]
NET_W    = 32
NET_D    = 4
SKIPS    = (2,)                                # skip-concat at coords_MLP index 2
FEAT_DIM = 32
OUT_CH   = 4
IN_CH    = 3 * (2 * (MAX_FREQ + 1) + 1)        # 27
FREQS    = tuple(float(2.0 ** k) for k in range(MAX_FREQ + 1))
N_PIECES = 2 * (MAX_FREQ + 1) + 1              # 9 width-3 embedding pieces

# Packing: 4 coordinate rows per lane-row (4 * NET_W == 128 lanes).
PACK     = 4
EMB_K    = PACK * IN_CH                        # 108 meaningful packed-embedding lanes
H_LANES  = PACK * NET_W                        # 128 packed hidden lanes
FO_LANES = PACK * (FEAT_DIM + OUT_CH)          # 144 packed feat|out lanes


def _build_static_patterns():
    """Per-lane constants for the packed embedding.

    Packed-embedding lane L = 12*p + 3*k + d  (p = piece, k = row-chunk, d = coord):
      p == 0     -> raw coordinate d of chunk k          (cmask = 1)
      p == 1..8  -> sin(x_d * F[(p-1)//2] + ((p-1)%2)*pi/2)   (= sin / cos pieces)
    """
    fpat  = np.zeros(EMB_K, np.float32)
    ppat  = np.zeros(EMB_K, np.float32)
    cmask = np.zeros(EMB_K, np.float32)
    for L in range(EMB_K):
        p = L // 12
        if p == 0:
            cmask[L] = 1.0
        else:
            fpat[L] = FREQS[(p - 1) // 2]
            ppat[L] = ((p - 1) % 2) * (math.pi / 2.0)
    rows = np.arange(EMB_K)
    p, m = rows // 12, rows % 12
    k, d = m // 3, m % 3
    # embed-input row feeding packed lane L, and which chunk L belongs to
    e_idx = np.where(p == 0, d, 3 + 3 * (p - 1) + d).astype(np.int32)
    chunk_oh = (k[:, None] == np.arange(PACK)[None, :]).astype(np.float32)
    return fpat, ppat, cmask, e_idx, chunk_oh


_FPAT, _PPAT, _CMASK, _E_IDX, _CHUNK_OH = _build_static_patterns()


def nerf_mlp_kernel(x_ref, wemb_ref, w1_ref, w3h_ref, wfo_ref, aux_ref,
                    feat_ref, out_ref):
    """One row-tile (block rows = 4*q, packed 4 rows per lane-row).

    x_ref    : (q, 12)     f32   4 coordinate rows per lane-row
    wemb_ref : (128, 256)  bf16  packed [coords_MLP[0] | skip (= W3 rows 0:27)]
    w1_ref   : (128, 128)  bf16  kron(I4, coords_MLP[1])
    w3h_ref  : (128, 128)  bf16  kron(I4, coords_MLP[3] rows 27:59)
    wfo_ref  : (128, 144)  bf16  kron(I4, [Wf | Wf@Wo])  (feature_MLP + out_MLP fused)
    aux_ref  : (8, 144)    f32   rows: freq, phase, coord-mask, b0, b1, b3, [bf|bo']
    feat_ref : (q, 128)    f32   packed feat slab
    out_ref  : (q, 16)     f32   packed out slab
    """
    f32, bf16 = jnp.float32, jnp.bfloat16

    x12 = x_ref[...]                                       # (q, 12) f32
    aux = aux_ref[...]                                     # (8, 144) f32
    fpat  = aux[0:1, :H_LANES]
    ppat  = aux[1:2, :H_LANES]
    cmask = aux[2:3, :H_LANES]
    b0, b1, b3 = aux[3:4, :H_LANES], aux[4:5, :H_LANES], aux[5:6, :H_LANES]
    bfo = aux[6:7, :]                                      # (1, 144)

    # --- packed positional embedding: one lane-broadcast + ONE transcendental ---
    # zc lane 12p+3k+d = x[chunk k, coord d]; lanes 108..127 are zero padding.
    pad = jnp.zeros((x12.shape[0], H_LANES - EMB_K), f32)
    zc = jnp.concatenate([x12] * N_PIECES + [pad], axis=1)            # (q, 128)
    emb = cmask * zc + jnp.sin(zc * fpat + ppat)                      # (q, 128) f32

    def dense(h, w_ref):
        return jnp.dot(h.astype(bf16), w_ref[...], preferred_element_type=f32)

    # coords_MLP[0] pre-activation and the NeRF skip term from one fused dot.
    t = dense(emb, wemb_ref)                               # (q, 256) = [preact0 | skip]
    h = jnp.maximum(t[:, :H_LANES] + b0, 0.0)              # coords_MLP[0] + ReLU
    h = jnp.maximum(dense(h, w1_ref) + b1, 0.0)            # coords_MLP[1] + ReLU
    # skip at idx 2:  cat([x_embed, h]) @ W3 == x_embed @ W3[:27] + h @ W3[27:]
    h = jnp.maximum(dense(h, w3h_ref) + t[:, H_LANES:] + b3, 0.0)     # coords_MLP[3]
    # feature_MLP + out_MLP fused:  [feat | out] = h @ [Wf | Wf@Wo] + [bf | bf@Wo+bo]
    fo = dense(h, wfo_ref) + bfo                           # (q, 144)
    feat_ref[...] = fo[:, :H_LANES]
    out_ref[...]  = fo[:, H_LANES:FO_LANES]


def init_params(key):
    """PyTorch-default-style Linear init: U(-1/sqrt(fan_in), +1/sqrt(fan_in)).

    Only the linears the forward pass actually applies are materialized
    (coords_MLP[2] exists in the module but is never used because idx 2 is a skip).
    Weights are stored transposed (in, out).
    """
    layer_dims = [(IN_CH, NET_W),              # coords_MLP[0]
                  (NET_W, NET_W),              # coords_MLP[1]
                  (IN_CH + NET_W, NET_W),      # coords_MLP[3] (post-skip, in=59)
                  (NET_W, FEAT_DIM),           # feature_MLP
                  (FEAT_DIM, OUT_CH)]          # out_MLP
    ws, bs = [], []
    for fan_in, fan_out in layer_dims:
        key, kw, kb = jax.random.split(key, 3)
        bound = 1.0 / math.sqrt(fan_in)
        ws.append(jax.random.uniform(kw, (fan_in, fan_out), jnp.float32,
                                     -bound, bound))
        bs.append(jax.random.uniform(kb, (fan_out,), jnp.float32, -bound, bound))
    return ws, bs


def _round_up(x, m):
    return (x + m - 1) // m * m


def _cdiv(a, b):
    return (a + b - 1) // b


def _pack_params(ws, bs):
    """Fold / block-diagonalize the NeRFMLP weights for the packed kernel (f32 math,
    bf16 only at the very end, per the v5e/accuracy guidance)."""
    f32, bf16 = jnp.float32, jnp.bfloat16
    w0, w1, w3, wf, wo = ws                    # stored (in, out)
    b0, b1, b3, bfe, bo = bs
    eye = jnp.eye(PACK, dtype=f32)

    # Packed embedding weight: packed lane L feeds embed-input row e_idx[L] of
    # W0 / W3[:27], routed to its chunk's 32 output lanes; rows 108..127 are zero.
    w0_rows  = w0[_E_IDX]                                            # (108, 32)
    w3x_rows = w3[:IN_CH][_E_IDX]                                    # (108, 32)
    left  = (_CHUNK_OH[:, :, None] * w0_rows[:, None, :]).reshape(EMB_K, H_LANES)
    right = (_CHUNK_OH[:, :, None] * w3x_rows[:, None, :]).reshape(EMB_K, H_LANES)
    wemb = jnp.zeros((H_LANES, 2 * H_LANES), f32)
    wemb = wemb.at[:EMB_K, :H_LANES].set(left).at[:EMB_K, H_LANES:].set(right)
    wemb = wemb.astype(bf16)                                         # (128, 256)

    w1_blk  = jnp.kron(eye, w1).astype(bf16)                         # (128, 128)
    w3h_blk = jnp.kron(eye, w3[IN_CH:]).astype(bf16)                 # (128, 128)
    wfo     = wf @ wo                                                # (32, 4) f32
    wfo_blk = jnp.concatenate([jnp.kron(eye, wf), jnp.kron(eye, wfo)],
                              axis=1).astype(bf16)                   # (128, 144)

    bo_f = bfe @ wo + bo                                             # fused out bias
    aux = jnp.zeros((8, FO_LANES), f32)
    aux = aux.at[0, :EMB_K].set(jnp.asarray(_FPAT))
    aux = aux.at[1, :EMB_K].set(jnp.asarray(_PPAT))
    aux = aux.at[2, :EMB_K].set(jnp.asarray(_CMASK))
    aux = aux.at[3, :H_LANES].set(jnp.tile(b0, PACK))
    aux = aux.at[4, :H_LANES].set(jnp.tile(b1, PACK))
    aux = aux.at[5, :H_LANES].set(jnp.tile(b3, PACK))
    aux = aux.at[6, :].set(jnp.concatenate([jnp.tile(bfe, PACK),
                                            jnp.tile(bo_f, PACK)]))
    return wemb, w1_blk, w3h_blk, wfo_blk, aux


@functools.partial(jax.jit, static_argnames=("block_n",))
def nerf_mlp_forward(x, ws, bs, *, block_n=2048):
    n = x.shape[0]
    assert x.shape[1] == 3

    # --- row tiling: big tiles (amortize ~0.35us/step); >=2 blocks for v7x's 2 TCs ---
    block = max(128, min(block_n, _round_up(n, 128)))
    block = _round_up(block, 128)
    if _cdiv(n, block) == 1 and block > 128:
        block = max(128, _round_up(_cdiv(n, 2), 128))
    num_blocks = _cdiv(n, block)
    n_pad = num_blocks * block
    q = block // PACK

    x_pad = x if n_pad == n else jnp.pad(x, ((0, n_pad - n), (0, 0)))
    x_slab = x_pad.reshape(n_pad // PACK, PACK * 3)     # free bitcast: 4 rows / lane-row

    wemb, w1_blk, w3h_blk, wfo_blk, aux = _pack_params(ws, bs)

    const = lambda i: (0, 0)
    feat_slab, out_slab = pl.pallas_call(
        nerf_mlp_kernel,
        out_shape=(jax.ShapeDtypeStruct((n_pad // PACK, H_LANES), jnp.float32),
                   jax.ShapeDtypeStruct((n_pad // PACK, PACK * OUT_CH), jnp.float32)),
        grid=(num_blocks,),
        in_specs=[
            pl.BlockSpec((q, PACK * 3), lambda i: (i, 0)),   # packed coords tile
            pl.BlockSpec(wemb.shape, const),                 # weights stay VMEM-resident
            pl.BlockSpec(w1_blk.shape, const),
            pl.BlockSpec(w3h_blk.shape, const),
            pl.BlockSpec(wfo_blk.shape, const),
            pl.BlockSpec(aux.shape, const),
        ],
        out_specs=(pl.BlockSpec((q, H_LANES), lambda i: (i, 0)),
                   pl.BlockSpec((q, PACK * OUT_CH), lambda i: (i, 0))),
        compiler_params=pltpu.CompilerParams(
            dimension_semantics=("parallel",),
            vmem_limit_bytes=32 * 1024 * 1024),
    )(x_slab, wemb, w1_blk, w3h_blk, wfo_blk, aux)

    # Free (bitcast) reshapes back to the module's output layout.
    feat = feat_slab.reshape(n_pad, FEAT_DIM)
    out = out_slab.reshape(n_pad, OUT_CH)
    if n_pad != n:
        feat, out = feat[:n], out[:n]
    return feat, out


def nerf_mlp_reference(x, ws, bs, *, matmul_dtype=jnp.float32):
    """Pure-JAX replica of NeRFMLP.forward (optionally with bf16 matmul operands)."""
    w0, w1, w3, wf, wo = ws
    b0, b1, b3, bfe, bo = bs

    def dot(a, w):
        return jnp.dot(a.astype(matmul_dtype), w.astype(matmul_dtype),
                       preferred_element_type=jnp.float32)

    xe = jnp.concatenate(
        [x] + [fn(x * f) for f in FREQS for fn in (jnp.sin, jnp.cos)], axis=-1)
    h = jnp.maximum(dot(xe, w0) + b0, 0.0)         # coords_MLP[0]
    h = jnp.maximum(dot(h, w1) + b1, 0.0)          # coords_MLP[1]
    h = jnp.concatenate([xe, h], axis=-1)          # skip at idx 2 (no linear applied)
    h = jnp.maximum(dot(h, w3) + b3, 0.0)          # coords_MLP[3]
    feat = dot(h, wf) + bfe                        # feature_MLP
    out = dot(feat, wo) + bo                       # out_MLP
    return feat, out


if __name__ == "__main__":
    key = jax.random.PRNGKey(0)
    kx, kp = jax.random.split(key)

    N = 1000                                       # small, non-aligned on purpose
    x = jax.random.uniform(kx, (N, 3), jnp.float32, minval=-1.0, maxval=1.0)
    ws, bs = init_params(kp)

    feat_bf, out_bf = nerf_mlp_reference(x, ws, bs, matmul_dtype=jnp.bfloat16)
    feat_f32, out_f32 = nerf_mlp_reference(x, ws, bs, matmul_dtype=jnp.float32)

    # Exercise both the multi-block path and the split-to-two-blocks path.
    for bn in (256, 2048):
        feat, out = nerf_mlp_forward(x, ws, bs, block_n=bn)
        jax.block_until_ready((feat, out))
        assert feat.shape == (N, FEAT_DIM) and out.shape == (N, OUT_CH)
        # Check vs a reference using the same bf16 matmul operands.
        assert jnp.allclose(feat, feat_bf, rtol=1e-2, atol=1e-2)
        assert jnp.allclose(out, out_bf, rtol=1e-2, atol=1e-2)
        # Semantics check vs the full-f32 PyTorch-equivalent forward
        # (bf16 MXU operands cost a few e-3 of absolute error; documented).
        assert jnp.allclose(feat, feat_f32, rtol=2e-2, atol=2e-2)
        assert jnp.allclose(out, out_f32, rtol=2e-2, atol=2e-2)

    print("KERNEL_OK")
</pallas_src>

<mosaic_0001>
module attributes {stable_mosaic.version = 11 : i64} {
  func.func @nerf_mlp_kernel(%arg0: i32, %arg1: memref<64x12xf32, #tpu.memory_space<vmem>>, %arg2: memref<128x256xbf16, #tpu.memory_space<vmem>>, %arg3: memref<128x128xbf16, #tpu.memory_space<vmem>>, %arg4: memref<128x128xbf16, #tpu.memory_space<vmem>>, %arg5: memref<128x144xbf16, #tpu.memory_space<vmem>>, %arg6: memref<8x144xf32, #tpu.memory_space<vmem>>, %arg7: memref<64x128xf32, #tpu.memory_space<vmem>>, %arg8: memref<64x16xf32, #tpu.memory_space<vmem>>) attributes {dimension_semantics = [#tpu.dimension_semantics<parallel>], iteration_bounds = array<i64: 4>, scalar_prefetch = 0 : i64, scratch_operands = 0 : i64, tpu.core_type = #tpu.core_type<tc>, window_params = [{transform_indices = @transform_0, window_bounds = array<i64: 64, 12>}, {pipeline_mode = #tpu.pipeline_mode<synchronous>, transform_indices = @transform_1, window_bounds = array<i64: 128, 256>}, {pipeline_mode = #tpu.pipeline_mode<synchronous>, transform_indices = @transform_2, window_bounds = array<i64: 128, 128>}, {pipeline_mode = #tpu.pipeline_mode<synchronous>, transform_indices = @transform_3, window_bounds = array<i64: 128, 128>}, {pipeline_mode = #tpu.pipeline_mode<synchronous>, transform_indices = @transform_4, window_bounds = array<i64: 128, 144>}, {pipeline_mode = #tpu.pipeline_mode<synchronous>, transform_indices = @transform_5, window_bounds = array<i64: 8, 144>}, {transform_indices = @transform_6, window_bounds = array<i64: 64, 128>}, {transform_indices = @transform_7, window_bounds = array<i64: 64, 16>}]} {
    %c0 = arith.constant 0 : index
    %c0_0 = arith.constant 0 : index
    %0 = vector.load %arg1[%c0, %c0_0] : memref<64x12xf32, #tpu.memory_space<vmem>>, vector<64x12xf32>
    %c0_1 = arith.constant 0 : index
    %c0_2 = arith.constant 0 : index
    %1 = vector.load %arg6[%c0_1, %c0_2] : memref<8x144xf32, #tpu.memory_space<vmem>>, vector<8x144xf32>
    %2 = vector.extract_strided_slice %1 {offsets = [0, 0], sizes = [1, 128], strides = [1, 1]} : vector<8x144xf32> to vector<1x128xf32>
    %3 = vector.extract_strided_slice %1 {offsets = [1, 0], sizes = [1, 128], strides = [1, 1]} : vector<8x144xf32> to vector<1x128xf32>
    %4 = vector.extract_strided_slice %1 {offsets = [2, 0], sizes = [1, 128], strides = [1, 1]} : vector<8x144xf32> to vector<1x128xf32>
    %5 = vector.extract_strided_slice %1 {offsets = [3, 0], sizes = [1, 128], strides = [1, 1]} : vector<8x144xf32> to vector<1x128xf32>
    %6 = vector.extract_strided_slice %1 {offsets = [4, 0], sizes = [1, 128], strides = [1, 1]} : vector<8x144xf32> to vector<1x128xf32>
    %7 = vector.extract_strided_slice %1 {offsets = [5, 0], sizes = [1, 128], strides = [1, 1]} : vector<8x144xf32> to vector<1x128xf32>
    %8 = vector.extract_strided_slice %1 {offsets = [6, 0], sizes = [1, 144], strides = [1, 1]} : vector<8x144xf32> to vector<1x144xf32>
    %cst = arith.constant 0.000000e+00 : f32
    %9 = vector.broadcast %cst : f32 to vector<64x20xf32>
    %10 = tpu.concatenate %0, %0, %0, %0, %0, %0, %0, %0, %0, %9 in 1 : vector<64x12xf32>, vector<64x12xf32>, vector<64x12xf32>, vector<64x12xf32>, vector<64x12xf32>, vector<64x12xf32>, vector<64x12xf32>, vector<64x12xf32>, vector<64x12xf32>, vector<64x20xf32> -> vector<64x128xf32>
    %11 = vector.broadcast %4 : vector<1x128xf32> to vector<64x128xf32>
    %12 = arith.mulf %11, %10 : vector<64x128xf32>
    %13 = vector.broadcast %2 : vector<1x128xf32> to vector<64x128xf32>
    %14 = arith.mulf %10, %13 : vector<64x128xf32>
    %15 = vector.broadcast %3 : vector<1x128xf32> to vector<64x128xf32>
    %16 = arith.addf %14, %15 : vector<64x128xf32>
    %17 = math.sin %16 : vector<64x128xf32>
    %18 = arith.addf %12, %17 : vector<64x128xf32>
    %19 = arith.truncf %18 : vector<64x128xf32> to vector<64x128xbf16>
    %c0_3 = arith.constant 0 : index
    %c0_4 = arith.constant 0 : index
    %20 = vector.load %arg2[%c0_3, %c0_4] : memref<128x256xbf16, #tpu.memory_space<vmem>>, vector<128x256xbf16>
    %cst_5 = arith.constant dense<0.000000e+00> : vector<64x256xf32>
    %21 = tpu.matmul %19, %20, %cst_5 {dimension_numbers = #tpu.dot_dimension_numbers<[1], [0], [0], [1], [0, 0, 1, 1], [], []>} : vector<64x128xbf16>, vector<128x256xbf16>, vector<64x256xf32> -> vector<64x256xf32>
    %22 = vector.extract_strided_slice %21 {offsets = [0, 0], sizes = [64, 128], strides = [1, 1]} : vector<64x256xf32> to vector<64x128xf32>
    %23 = vector.broadcast %5 : vector<1x128xf32> to vector<64x128xf32>
    %24 = arith.addf %22, %23 : vector<64x128xf32>
    %cst_6 = arith.constant 0.000000e+00 : f32
    %25 = vector.broadcast %cst_6 : f32 to vector<64x128xf32>
    %26 = arith.maximumf %24, %25 : vector<64x128xf32>
    %27 = arith.truncf %26 : vector<64x128xf32> to vector<64x128xbf16>
    %c0_7 = arith.constant 0 : index
    %c0_8 = arith.constant 0 : index
    %28 = vector.load %arg3[%c0_7, %c0_8] : memref<128x128xbf16, #tpu.memory_space<vmem>>, vector<128x128xbf16>
    %cst_9 = arith.constant dense<0.000000e+00> : vector<64x128xf32>
    %29 = tpu.matmul %27, %28, %cst_9 {dimension_numbers = #tpu.dot_dimension_numbers<[1], [0], [0], [1], [0, 0, 1, 1], [], []>} : vector<64x128xbf16>, vector<128x128xbf16>, vector<64x128xf32> -> vector<64x128xf32>
    %30 = vector.broadcast %6 : vector<1x128xf32> to vector<64x128xf32>
    %31 = arith.addf %29, %30 : vector<64x128xf32>
    %cst_10 = arith.constant 0.000000e+00 : f32
    %32 = vector.broadcast %cst_10 : f32 to vector<64x128xf32>
    %33 = arith.maximumf %31, %32 : vector<64x128xf32>
    %34 = arith.truncf %33 : vector<64x128xf32> to vector<64x128xbf16>
    %c0_11 = arith.constant 0 : index
    %c0_12 = arith.constant 0 : index
    %35 = vector.load %arg4[%c0_11, %c0_12] : memref<128x128xbf16, #tpu.memory_space<vmem>>, vector<128x128xbf16>
    %cst_13 = arith.constant dense<0.000000e+00> : vector<64x128xf32>
    %36 = tpu.matmul %34, %35, %cst_13 {dimension_numbers = #tpu.dot_dimension_numbers<[1], [0], [0], [1], [0, 0, 1, 1], [], []>} : vector<64x128xbf16>, vector<128x128xbf16>, vector<64x128xf32> -> vector<64x128xf32>
    %37 = vector.extract_strided_slice %21 {offsets = [0, 128], sizes = [64, 128], strides = [1, 1]} : vector<64x256xf32> to vector<64x128xf32>
    %38 = arith.addf %36, %37 : vector<64x128xf32>
    %39 = vector.broadcast %7 : vector<1x128xf32> to vector<64x128xf32>
    %40 = arith.addf %38, %39 : vector<64x128xf32>
    %cst_14 = arith.constant 0.000000e+00 : f32
    %41 = vector.broadcast %cst_14 : f32 to vector<64x128xf32>
    %42 = arith.maximumf %40, %41 : vector<64x128xf32>
    %43 = arith.truncf %42 : vector<64x128xf32> to vector<64x128xbf16>
    %c0_15 = arith.constant 0 : index
    %c0_16 = arith.constant 0 : index
    %44 = vector.load %arg5[%c0_15, %c0_16] : memref<128x144xbf16, #tpu.memory_space<vmem>>, vector<128x144xbf16>
    %cst_17 = arith.constant dense<0.000000e+00> : vector<64x144xf32>
    %45 = tpu.matmul %43, %44, %cst_17 {dimension_numbers = #tpu.dot_dimension_numbers<[1], [0], [0], [1], [0, 0, 1, 1], [], []>} : vector<64x128xbf16>, vector<128x144xbf16>, vector<64x144xf32> -> vector<64x144xf32>
    %46 = vector.broadcast %8 : vector<1x144xf32> to vector<64x144xf32>
    %47 = arith.addf %45, %46 : vector<64x144xf32>
    %48 = vector.extract_strided_slice %47 {offsets = [0, 0], sizes = [64, 128], strides = [1, 1]} : vector<64x144xf32> to vector<64x128xf32>
    %c0_18 = arith.constant 0 : index
    %c0_19 = arith.constant 0 : index
    %49 = vector.load %arg7[%c0_18, %c0_19] : memref<64x128xf32, #tpu.memory_space<vmem>>, vector<64x128xf32>
    tpu.vector_store %arg7[%c0_18, %c0_19], %48 {strides = array<i32>} : memref<64x128xf32, #tpu.memory_space<vmem>>, vector<64x128xf32>,
    %50 = vector.extract_strided_slice %47 {offsets = [0, 128], sizes = [64, 16], strides = [1, 1]} : vector<64x144xf32> to vector<64x16xf32>
    %c0_20 = arith.constant 0 : index
    %c0_21 = arith.constant 0 : index
    %51 = vector.load %arg8[%c0_20, %c0_21] : memref<64x16xf32, #tpu.memory_space<vmem>>, vector<64x16xf32>
    tpu.vector_store %arg8[%c0_20, %c0_21], %50 {strides = array<i32>} : memref<64x16xf32, #tpu.memory_space<vmem>>, vector<64x16xf32>,
    return
  }
  func.func @transform_0(%arg0: i32) -> (i32, i32) {
    %c0_i32 = arith.constant 0 : i32
    %c0_i32_0 = arith.constant 0 : i32
    return %arg0, %c0_i32 : i32, i32
  }
  func.func @transform_1(%arg0: i32) -> (i32, i32) {
    %c0_i32 = arith.constant 0 : i32
    %c0_i32_0 = arith.constant 0 : i32
    %c0_i32_1 = arith.constant 0 : i32
    return %c0_i32, %c0_i32_0 : i32, i32
  }
  func.func @transform_2(%arg0: i32) -> (i32, i32) {
    %c0_i32 = arith.constant 0 : i32
    %c0_i32_0 = arith.constant 0 : i32
    %c0_i32_1 = arith.constant 0 : i32
    return %c0_i32, %c0_i32_0 : i32, i32
  }
  func.func @transform_3(%arg0: i32) -> (i32, i32) {
    %c0_i32 = arith.constant 0 : i32
    %c0_i32_0 = arith.constant 0 : i32
    %c0_i32_1 = arith.constant 0 : i32
    return %c0_i32, %c0_i32_0 : i32, i32
  }
  func.func @transform_4(%arg0: i32) -> (i32, i32) {
    %c0_i32 = arith.constant 0 : i32
    %c0_i32_0 = arith.constant 0 : i32
    %c0_i32_1 = arith.constant 0 : i32
    return %c0_i32, %c0_i32_0 : i32, i32
  }
  func.func @transform_5(%arg0: i32) -> (i32, i32) {
    %c0_i32 = arith.constant 0 : i32
    %c0_i32_0 = arith.constant 0 : i32
    %c0_i32_1 = arith.constant 0 : i32
    return %c0_i32, %c0_i32_0 : i32, i32
  }
  func.func @transform_6(%arg0: i32) -> (i32, i32) {
    %c0_i32 = arith.constant 0 : i32
    %c0_i32_0 = arith.constant 0 : i32
    return %arg0, %c0_i32 : i32, i32
  }
  func.func @transform_7(%arg0: i32) -> (i32, i32) {
    %c0_i32 = arith.constant 0 : i32
    %c0_i32_0 = arith.constant 0 : i32
    return %arg0, %c0_i32 : i32, i32
  }
}

</mosaic_0001>

<llo_original>
// kernel: tile.28
$region0: #{tile.28}
  #allocation0 [shape = 's32[1]{0}', space=sflag, size = 0x4, scoped, tag = 'scoped memory for tile.28']
  %s0 = inlined_call_operand.vmem [shape: f32[32], index: 0, kind: input, shape index: {}]
  %s1 = inlined_call_operand.vmem [shape: f32[4,32], index: 1, kind: output, shape index: {}]
  // Predicated region
  $region2: #{tile.28} parent=0 // pred_check
    _
  $region3: #{tile.28} parent=0 // pred_check_branch
    %3 = sbr.rel (0) target = $region5
  $region4: #{tile.28} parent=0 // pred_region
    _
  $region5: #{tile.28} parent=0 // pred_fallthru
    _
  %v4 = vld [vmem:[%s0] ss:$0 sm:$0xff]
  %5 = vst [vmem:[%s1] sm:$0xf] %v4

// kernel: tile.48
$region0: #{tile.48}
  #allocation0 [shape = 's32[1]{0}', space=sflag, size = 0x4, scoped, tag = 'scoped memory for tile.48']
  %s0 = inlined_call_operand.vmem [shape: f32[4], index: 0, kind: input, shape index: {}]
  %s1 = inlined_call_operand.vmem [shape: f32[4,4], index: 1, kind: output, shape index: {}]
  // Predicated region
  $region2: #{tile.48} parent=0 // pred_check
    _
  $region3: #{tile.48} parent=0 // pred_check_branch
    %3 = sbr.rel (0) target = $region5
  $region4: #{tile.48} parent=0 // pred_region
    _
  $region5: #{tile.48} parent=0 // pred_fallthru
    _
  %v4 = vld [vmem:[%s0] ss:$0 sm:$0xff]
  %5 = vst [vmem:[%s1] sm:$0xf] %v4

// kernel: tile.49
$region0: #{tile.49}
  %s0 = inlined_call_operand.vmem [shape: f32[4,4], index: 0, kind: input, shape index: {}]
  %s1 = inlined_call_operand.vmem [shape: f32[16], index: 1, kind: output, shape index: {}]
  $region1: #{tile.49} parent=0
    #allocation0 [shape = 'u8[4096]{0}', space=vmem, size = 0x1000, scoped, tag = 'scoped mem for output reshape']
    #allocation1 [shape = 'u8[4096]{0}', space=vmem, size = 0x1000, scoped, tag = 'scoped mem for input reshape']
    %s3 = sshll.u32 1, 4
    %s4 = ssub.s32 %s3, 1
    %v5 = vld [vmem:[%s0] sm:%s4]
    %6 = vst [vmem:[#allocation1] sm:%s4] %v5
    %v7 = vld [vmem:[#allocation1] sm:$0x1]
    %vm8 = vcmask 31744
    %9 = vst.msk [vmem:[#allocation0] sm:$0x1] %vm8, %v7
    %s10 = scalar_lea.vmem [#allocation1], 3
    %v11 = vld [vmem:[%s10] sm:$0x1]
    %12 = vrot.lane.b32.xlu0 %v11, 12
    %v13 = vpop.permute.xlu0 %12
    %vm14 = vcmask 130144
    %15 = vst.msk [vmem:[#allocation0] sm:$0x1] %vm14, %v13
    %s16 = scalar_lea.vmem [#allocation1], 2
    %v17 = vld [vmem:[%s16] sm:$0x1]
    %18 = vrot.lane.b32.xlu0 %v17, 8
    %v19 = vpop.permute.xlu0 %18
    %vm20 = vcmask 97344
    %21 = vst.msk [vmem:[#allocation0] sm:$0x1] %vm20, %v19
    %s22 = scalar_lea.vmem [#allocation1], 1
    %v23 = vld [vmem:[%s22] sm:$0x1]
    %24 = vrot.lane.b32.xlu0 %v23, 4
    %v25 = vpop.permute.xlu0 %24
    %vm26 = vcmask 64544
    %27 = vst.msk [vmem:[#allocation0] sm:$0x1] %vm26, %v25
    %s29 = sshll.u32 1, 1
    %s30 = ssub.s32 %s29, 1
    %v32 = vld [vmem:[#allocation0] sm:%s30]
    %s33 = sshll.u32 1, 1
    %s34 = ssub.s32 %s33, 1
    %35 = vst [vmem:[%s1] sm:%s34] %v32

// kernel: tile.44
$region0: #{tile.44}
  %s0 = inlined_call_operand.vmem [shape: f32[4,32], index: 0, kind: input, shape index: {}]
  %s1 = inlined_call_operand.vmem [shape: f32[128], index: 1, kind: output, shape index: {}]
  $region1: #{tile.44} parent=0
    #allocation0 [shape = 'u8[4096]{0}', space=vmem, size = 0x1000, scoped, tag = 'scoped mem for output reshape']
    #allocation1 [shape = 'u8[4096]{0}', space=vmem, size = 0x1000, scoped, tag = 'scoped mem for input reshape']
    %s3 = sshll.u32 1, 4
    %s4 = ssub.s32 %s3, 1
    %v5 = vld [vmem:[%s0] sm:%s4]
    %6 = vst [vmem:[#allocation1] sm:%s4] %v5
    %v7 = vld [vmem:[#allocation1] sm:$0x1]
    %vm8 = vcmask 261120
    %9 = vst.msk [vmem:[#allocation0] sm:$0x1] %vm8, %v7
    %s10 = scalar_lea.vmem [#allocation1], 3
    %v11 = vld [vmem:[%s10] sm:$0x1]
    %12 = vrot.lane.b32.xlu0 %v11, 96
    %v13 = vpop.permute.xlu0 %12
    %vm14 = vcmask 1048320
    %15 = vst.msk [vmem:[#allocation0] sm:$0x1] %vm14, %v13
    %s16 = scalar_lea.vmem [#allocation1], 2
    %v17 = vld [vmem:[%s16] sm:$0x1]
    %18 = vrot.lane.b32.xlu0 %v17, 64
    %v19 = vpop.permute.xlu0 %18
    %vm20 = vcmask 785920
    %21 = vst.msk [vmem:[#allocation0] sm:$0x1] %vm20, %v19
    %s22 = scalar_lea.vmem [#allocation1], 1
    %v23 = vld [vmem:[%s22] sm:$0x1]
    %24 = vrot.lane.b32.xlu0 %v23, 32
    %v25 = vpop.permute.xlu0 %24
    %vm26 = vcmask 523520
    %27 = vst.msk [vmem:[#allocation0] sm:$0x1] %vm26, %v25
    %s29 = sshll.u32 1, 1
    %s30 = ssub.s32 %s29, 1
    %v32 = vld [vmem:[#allocation0] sm:%s30]
    %s33 = sshll.u32 1, 1
    %s34 = ssub.s32 %s33, 1
    %35 = vst [vmem:[%s1] sm:%s34] %v32

// kernel: nerf_mlp_forward.1
$region0: #{nerf_mlp_forward.1}
  #allocation0 [shape = 'u32[]', space=smem, size = 0x4, offset = 0x4, fixed_abs, tag = 'smem constant byte address 0x4 - core index']
  #allocation1 [shape = 'u32[144,128]{1,0:T(1,128)}', space=vmem, size = 0x12000, scoped, tag = 'internal scratch']
  %s0 = inlined_call_operand.vmem [shape: f32[256,12], index: 0, kind: input, shape index: {}]
  %s1 = inlined_call_operand.vmem [shape: bf16[128,256], index: 1, kind: input, shape index: {}]
  %s2 = inlined_call_operand.vmem [shape: bf16[128,128], index: 2, kind: input, shape index: {}]
  %s3 = inlined_call_operand.vmem [shape: bf16[128,128], index: 3, kind: input, shape index: {}]
  %s4 = inlined_call_operand.vmem [shape: bf16[128,144], index: 4, kind: input, shape index: {}]
  %s5 = inlined_call_operand.vmem [shape: f32[8,144], index: 5, kind: input, shape index: {}]
  %s6 = inlined_call_operand.vmem [shape: f32[256,128], index: 6, kind: output, shape index: {0}]
  %s7 = inlined_call_operand.vmem [shape: f32[256,16], index: 7, kind: output, shape index: {1}]
  %8 = xla_tuple %s6, %s7
  %s9 = sld [smem:[#allocation0]]
  $region65: #{nerf_mlp_forward.1} parent=0
    _
  %s11 = ssub.s32 1, %s9
  %s12 = scalar_select 0, %s11, %s9
  loop: start=0, step=1, limit=6
  $region2: #{nerf_mlp_forward.1} parent=0 // loop_pre_header
    _
  $region3: #{nerf_mlp_forward.1} parent=0 // loop_header
    %s14 = sphi 0, %s18
    %p15 = scmp.ge.s32.totalorder %s14, 6
    %s24 = sphi 0, %s26
    %s27 = sphi 0, %s24
    %s28 = sphi 0, %s27
    %s44 = sphi 0, %s28
    %s48 = sphi 0, %s48
    %s50 = sphi 0, %s48
    %s51 = sphi 0, %s50
    %s65 = sphi 0, %s51
    %s69 = sphi 0, %s69
    %s71 = sphi 0, %s69
    %s72 = sphi 0, %s71
    %s86 = sphi 0, %s72
    %s90 = sphi 0, %s90
    %s92 = sphi 0, %s90
    %s93 = sphi 0, %s92
    %s107 = sphi 0, %s93
    %s111 = sphi 0, %s111
    %s113 = sphi 0, %s111
    %s114 = sphi 0, %s113
    %s128 = sphi 0, %s114
    %s132 = sphi 0, %s132
    %s134 = sphi 0, %s132
    %s135 = sphi 0, %s134
    %s149 = sphi 0, %s135
    %s155 = sphi 0, %s157
    %s158 = sphi 0, %s155
    %s159 = sphi 0, %s158
    %s175 = sphi 0, %s159
    %s181 = sphi 0, %s183
    %s184 = sphi 0, %s181
    %s185 = sphi 0, %s184
    %s201 = sphi 0, %s185
  $region4: #{nerf_mlp_forward.1} parent=0 // loop_header_branch
    %17 = sbr.rel (%p15) target = $region8
  $region5: #{nerf_mlp_forward.1} parent=0 // loop_body
    %s19 = ssub.s32 %s14, 1
    %s20 = ssub.s32 %s14, 2
    %s21 = sadd.s32 %s14, 1
    %s22 = ssub.s32 %s14, %s21
    %p23 = scmp.eq.s32.totalorder %s22, 0
    %s25 = sadd.s32 %s24, 1
    %s26 = scalar_select %p23, %s24, %s25
    %p29 = pneg %p23
    %p30 = scmp.eq.s32.totalorder %s14, 3
    %p31 = por %p29, %p30
    %p32 = scmp.ne.s32.totalorder %s24, %s27
    %p33 = scmp.eq.s32.totalorder %s14, 0
    %p34 = por %p32, %p33
    %p35 = scmp.ne.s32.totalorder %s24, %s27
    %p36 = scmp.eq.s32.totalorder %s19, 3
    %p37 = por %p35, %p36
    %p38 = scmp.ne.s32.totalorder %s27, %s28
    %p39 = scmp.eq.s32.totalorder %s19, 0
    %p40 = por %p38, %p39
    %p41 = scmp.ne.s32.totalorder %s27, %s28
    %p42 = scmp.eq.s32.totalorder %s20, 3
    %p43 = por %p41, %p42
    %p45 = scmp.ne.s32.totalorder %s28, %s44
    %p46 = scmp.eq.s32.totalorder %s20, 0
    %p47 = por %p45, %p46
    %s49 = sadd.s32 %s48, 1
    %p52 = scmp.eq.s32.totalorder %s14, 3
    %p53 = scmp.ne.s32.totalorder %s48, %s50
    %p54 = scmp.eq.s32.totalorder %s14, 0
    %p55 = por %p53, %p54
    %p56 = scmp.ne.s32.totalorder %s48, %s50
    %p57 = scmp.eq.s32.totalorder %s19, 3
    %p58 = por %p56, %p57
    %p59 = scmp.ne.s32.totalorder %s50, %s51
    %p60 = scmp.eq.s32.totalorder %s19, 0
    %p61 = por %p59, %p60
    %p62 = scmp.ne.s32.totalorder %s50, %s51
    %p63 = scmp.eq.s32.totalorder %s20, 3
    %p64 = por %p62, %p63
    %p66 = scmp.ne.s32.totalorder %s51, %s65
    %p67 = scmp.eq.s32.totalorder %s20, 0
    %p68 = por %p66, %p67
    %s70 = sadd.s32 %s69, 1
    %p73 = scmp.eq.s32.totalorder %s14, 3
    %p74 = scmp.ne.s32.totalorder %s69, %s71
    %p75 = scmp.eq.s32.totalorder %s14, 0
    %p76 = por %p74, %p75
    %p77 = scmp.ne.s32.totalorder %s69, %s71
    %p78 = scmp.eq.s32.totalorder %s19, 3
    %p79 = por %p77, %p78
    %p80 = scmp.ne.s32.totalorder %s71, %s72
    %p81 = scmp.eq.s32.totalorder %s19, 0
    %p82 = por %p80, %p81
    %p83 = scmp.ne.s32.totalorder %s71, %s72
    %p84 = scmp.eq.s32.totalorder %s20, 3
    %p85 = por %p83, %p84
    %p87 = scmp.ne.s32.totalorder %s72, %s86
    %p88 = scmp.eq.s32.totalorder %s20, 0
    %p89 = por %p87, %p88
    %s91 = sadd.s32 %s90, 1
    %p94 = scmp.eq.s32.totalorder %s14, 3
    %p95 = scmp.ne.s32.totalorder %s90, %s92
    %p96 = scmp.eq.s32.totalorder %s14, 0
    %p97 = por %p95, %p96
    %p98 = scmp.ne.s32.totalorder %s90, %s92
    %p99 = scmp.eq.s32.totalorder %s19, 3
    %p100 = por %p98, %p99
    %p101 = scmp.ne.s32.totalorder %s92, %s93
    %p102 = scmp.eq.s32.totalorder %s19, 0
    %p103 = por %p101, %p102
    %p104 = scmp.ne.s32.totalorder %s92, %s93
    %p105 = scmp.eq.s32.totalorder %s20, 3
    %p106 = por %p104, %p105
    %p108 = scmp.ne.s32.totalorder %s93, %s107
    %p109 = scmp.eq.s32.totalorder %s20, 0
    %p110 = por %p108, %p109
    %s112 = sadd.s32 %s111, 1
    %p115 = scmp.eq.s32.totalorder %s14, 3
    %p116 = scmp.ne.s32.totalorder %s111, %s113
    %p117 = scmp.eq.s32.totalorder %s14, 0
    %p118 = por %p116, %p117
    %p119 = scmp.ne.s32.totalorder %s111, %s113
    %p120 = scmp.eq.s32.totalorder %s19, 3
    %p121 = por %p119, %p120
    %p122 = scmp.ne.s32.totalorder %s113, %s114
    %p123 = scmp.eq.s32.totalorder %s19, 0
    %p124 = por %p122, %p123
    %p125 = scmp.ne.s32.totalorder %s113, %s114
    %p126 = scmp.eq.s32.totalorder %s20, 3
    %p127 = por %p125, %p126
    %p129 = scmp.ne.s32.totalorder %s114, %s128
    %p130 = scmp.eq.s32.totalorder %s20, 0
    %p131 = por %p129, %p130
    %s133 = sadd.s32 %s132, 1
    %p136 = scmp.eq.s32.totalorder %s14, 3
    %p137 = scmp.ne.s32.totalorder %s132, %s134
    %p138 = scmp.eq.s32.totalorder %s14, 0
    %p139 = por %p137, %p138
    %p140 = scmp.ne.s32.totalorder %s132, %s134
    %p141 = scmp.eq.s32.totalorder %s19, 3
    %p142 = por %p140, %p141
    %p143 = scmp.ne.s32.totalorder %s134, %s135
    %p144 = scmp.eq.s32.totalorder %s19, 0
    %p145 = por %p143, %p144
    %p146 = scmp.ne.s32.totalorder %s134, %s135
    %p147 = scmp.eq.s32.totalorder %s20, 3
    %p148 = por %p146, %p147
    %p150 = scmp.ne.s32.totalorder %s135, %s149
    %p151 = scmp.eq.s32.totalorder %s20, 0
    %p152 = por %p150, %p151
    %s153 = ssub.s32 %s14, %s21
    %p154 = scmp.eq.s32.totalorder %s153, 0
    %s156 = sadd.s32 %s155, 1
    %s157 = scalar_select %p154, %s155, %s156
    %p160 = pneg %p154
    %p161 = scmp.eq.s32.totalorder %s14, 3
    %p162 = por %p160, %p161
    %p163 = scmp.ne.s32.totalorder %s155, %s158
    %p164 = scmp.eq.s32.totalorder %s14, 0
    %p165 = por %p163, %p164
    %p166 = scmp.ne.s32.totalorder %s155, %s158
    %p167 = scmp.eq.s32.totalorder %s19, 3
    %p168 = por %p166, %p167
    %p169 = scmp.ne.s32.totalorder %s158, %s159
    %p170 = scmp.eq.s32.totalorder %s19, 0
    %p171 = por %p169, %p170
    %p172 = scmp.ne.s32.totalorder %s158, %s159
    %p173 = scmp.eq.s32.totalorder %s20, 3
    %p174 = por %p172, %p173
    %p176 = scmp.ne.s32.totalorder %s159, %s175
    %p177 = scmp.eq.s32.totalorder %s20, 0
    %p178 = por %p176, %p177
    %s179 = ssub.s32 %s14, %s21
    %p180 = scmp.eq.s32.totalorder %s179, 0
    %s182 = sadd.s32 %s181, 1
    %s183 = scalar_select %p180, %s181, %s182
    %p186 = pneg %p180
    %p187 = scmp.eq.s32.totalorder %s14, 3
    %p188 = por %p186, %p187
    %p189 = scmp.ne.s32.totalorder %s181, %s184
    %p190 = scmp.eq.s32.totalorder %s14, 0
    %p191 = por %p189, %p190
    %p192 = scmp.ne.s32.totalorder %s181, %s184
    %p193 = scmp.eq.s32.totalorder %s19, 3
    %p194 = por %p192, %p193
    %p195 = scmp.ne.s32.totalorder %s184, %s185
    %p196 = scmp.eq.s32.totalorder %s19, 0
    %p197 = por %p195, %p196
    %p198 = scmp.ne.s32.totalorder %s184, %s185
    %p199 = scmp.eq.s32.totalorder %s20, 3
    %p200 = por %p198, %p199
    %p202 = scmp.ne.s32.totalorder %s185, %s201
    %p203 = scmp.eq.s32.totalorder %s20, 0
    %p204 = por %p202, %p203
    %p205 = scmp.le.s32.totalorder 1, %s14
    %p206 = scmp.lt.s32.totalorder %s14, 5
    %p207 = pnand %p205, %p206
    %p208 = pneg %p207
    // Predicated region
    $region9: #{nerf_mlp_forward.1} parent=5 // pred_check
      _
    $region10: #{nerf_mlp_forward.1} parent=5 // pred_check_branch
      %210 = sbr.rel (%p207) target = $region12
    $region11: #{nerf_mlp_forward.1} parent=5 // pred_region
      %s211 = ssub.s32 %s14, 1
      // Predicated region
      $region13: #{nerf_mlp_forward.1} parent=11 // pred_check
        %p212 = pneg %p61
      $region14: #{nerf_mlp_forward.1} parent=11 // pred_check_branch
        %214 = sbr.rel (%p212) target = $region16
      $region15: #{nerf_mlp_forward.1} parent=11 // pred_region
        _
      $region16: #{nerf_mlp_forward.1} parent=11 // pred_fallthru
        _
      // Predicated region
      $region17: #{nerf_mlp_forward.1} parent=11 // pred_check
        %p215 = pneg %p82
      $region18: #{nerf_mlp_forward.1} parent=11 // pred_check_branch
        %217 = sbr.rel (%p215) target = $region20
      $region19: #{nerf_mlp_forward.1} parent=11 // pred_region
        _
      $region20: #{nerf_mlp_forward.1} parent=11 // pred_fallthru
        _
      // Predicated region
      $region21: #{nerf_mlp_forward.1} parent=11 // pred_check
        %p218 = pneg %p103
      $region22: #{nerf_mlp_forward.1} parent=11 // pred_check_branch
        %220 = sbr.rel (%p218) target = $region24
      $region23: #{nerf_mlp_forward.1} parent=11 // pred_region
        _
      $region24: #{nerf_mlp_forward.1} parent=11 // pred_fallthru
        _
      // Predicated region
      $region25: #{nerf_mlp_forward.1} parent=11 // pred_check
        %p221 = pneg %p124
      $region26: #{nerf_mlp_forward.1} parent=11 // pred_check_branch
        %223 = sbr.rel (%p221) target = $region28
      $region27: #{nerf_mlp_forward.1} parent=11 // pred_region
        _
      $region28: #{nerf_mlp_forward.1} parent=11 // pred_fallthru
        _
      // Predicated region
      $region29: #{nerf_mlp_forward.1} parent=11 // pred_check
        %p224 = pneg %p145
      $region30: #{nerf_mlp_forward.1} parent=11 // pred_check_branch
        %226 = sbr.rel (%p224) target = $region32
      $region31: #{nerf_mlp_forward.1} parent=11 // pred_region
        _
      $region32: #{nerf_mlp_forward.1} parent=11 // pred_fallthru
        _
    $region12: #{nerf_mlp_forward.1} parent=5 // pred_fallthru
      _
    %p227 = scmp.lt.s32.totalorder %s14, 4
    // Predicated region
    $region33: #{nerf_mlp_forward.1} parent=5 // pred_check
      %p228 = pneg %p227
    $region34: #{nerf_mlp_forward.1} parent=5 // pred_check_branch
      %230 = sbr.rel (%p228) target = $region36
    $region35: #{nerf_mlp_forward.1} parent=5 // pred_region
      // Predicated region
      $region37: #{nerf_mlp_forward.1} parent=35 // pred_check
        %p231 = pneg %p34
      $region38: #{nerf_mlp_forward.1} parent=35 // pred_check_branch
        %233 = sbr.rel (%p231) target = $region40
      $region39: #{nerf_mlp_forward.1} parent=35 // pred_region
        %s234 = smul.u32 8, %s14
        %p235 = scmp.lt.s32.totalorder %s234, 31
        %s236 = scalar_select %p235, %s234, 31
        %s237 = smul.addr %s236, 8
        %s238 = scalar_lea.vmem %s0, %s237
        %s239 = smul.u32 8, %s14
      $region40: #{nerf_mlp_forward.1} parent=35 // pred_fallthru
        _
    $region36: #{nerf_mlp_forward.1} parent=5 // pred_fallthru
      _
    %p240 = scmp.le.s32.totalorder 1, %s14
    %p241 = scmp.lt.s32.totalorder %s14, 5
    %p242 = pnand %p240, %p241
    %p243 = pneg %p242
    // Predicated region
    $region41: #{nerf_mlp_forward.1} parent=5 // pred_check
      _
    $region42: #{nerf_mlp_forward.1} parent=5 // pred_check_branch
      %245 = sbr.rel (%p242) target = $region44
    $region43: #{nerf_mlp_forward.1} parent=5 // pred_region
      %s246 = ssub.s32 %s14, 1
      %s247 = smul.u32 8, %s19
      %p248 = scmp.lt.s32.totalorder %s247, 31
      %s249 = scalar_select %p248, %s247, 31
      %s250 = smul.addr %s249, 8
      %s251 = scalar_lea.vmem %s0, %s250
      %p252 = pneg %p40
      %p253 = pneg %p37
      %p254 = pneg %p61
      %p255 = pneg %p58
      %p256 = pneg %p82
      %p257 = pneg %p79
      %p258 = pneg %p103
      %p259 = pneg %p100
      %p260 = pneg %p124
      %p261 = pneg %p121
      %p262 = pneg %p145
      %p263 = pneg %p142
      %p264 = pneg %p171
      %p265 = pneg %p168
      %s266 = smul.u32 8, %s19
      %p267 = scmp.lt.s32.totalorder %s266, 31
      %s268 = scalar_select %p267, %s266, 31
      %s269 = smul.addr %s268, 8
      %s270 = scalar_lea.vmem %s6, %s269
      %p271 = pneg %p197
      %p272 = pneg %p194
      %s273 = smul.u32 8, %s19
      %p274 = scmp.lt.s32.totalorder %s273, 31
      %s275 = scalar_select %p274, %s273, 31
      %s276 = smul.addr %s275, 8
      %s277 = scalar_lea.vmem %s7, %s276
      %s278 = smul.u32 8, %s19
      %p279 = scmp.lt.s32.totalorder %s278, 31
      %s280 = scalar_select %p279, %s278, 31
      %s281 = smul.addr %s280, 8
      %s282 = scalar_lea.vmem %s0, %s281
      %s283 = smul.u32 8, %s19
      %s284 = smul.u32 8, %s19
      %p285 = scmp.lt.s32.totalorder %s284, 31
      %s286 = scalar_select %p285, %s284, 31
      %s287 = smul.addr %s286, 8
      %s288 = scalar_lea.vmem %s6, %s287
      %s289 = smul.u32 8, %s19
      %s290 = smul.u32 8, %s19
      %p291 = scmp.lt.s32.totalorder %s290, 31
      %s292 = scalar_select %p291, %s290, 31
      %s293 = smul.addr %s292, 8
      %s294 = scalar_lea.vmem %s7, %s293
      %s295 = smul.u32 8, %s19
      %v297 = vld [vmem:[%s282] sm:$0xff]
      %v298 = vld [vmem:[%s282 + $0x8] sm:$0xff]
      %v299 = vld [vmem:[%s282 + $0x10] sm:$0xff]
      %v300 = vld [vmem:[%s282 + $0x18] sm:$0xff]
      %v301 = vld [vmem:[%s282 + $0x20] sm:$0xff]
      %v302 = vld [vmem:[%s282 + $0x28] sm:$0xff]
      %v303 = vld [vmem:[%s282 + $0x30] sm:$0xff]
      %v304 = vld [vmem:[%s282 + $0x38] sm:$0xff]
      %v305 = vld [vmem:[%s5] sm:$0xff]
      %v306 = vld [vmem:[%s5 + $0x8] sm:$0xff]
      %315 = vrot.lane.b32.xlu0 %v297, 12
      %v316 = vpop.permute.xlu0 %315
      %317 = vrot.lane.b32.xlu0 %v298, 12
      %v318 = vpop.permute.xlu0 %317
      %319 = vrot.lane.b32.xlu0 %v299, 12
      %v320 = vpop.permute.xlu0 %319
      %321 = vrot.lane.b32.xlu0 %v300, 12
      %v322 = vpop.permute.xlu0 %321
      %323 = vrot.lane.b32.xlu0 %v301, 12
      %v324 = vpop.permute.xlu0 %323
      %325 = vrot.lane.b32.xlu0 %v302, 12
      %v326 = vpop.permute.xlu0 %325
      %327 = vrot.lane.b32.xlu0 %v303, 12
      %v328 = vpop.permute.xlu0 %327
      %329 = vrot.lane.b32.xlu0 %v304, 12
      %v330 = vpop.permute.xlu0 %329
      %339 = vrot.lane.b32.xlu0 %v297, 24
      %v340 = vpop.permute.xlu0 %339
      %341 = vrot.lane.b32.xlu0 %v298, 24
      %v342 = vpop.permute.xlu0 %341
      %343 = vrot.lane.b32.xlu0 %v299, 24
      %v344 = vpop.permute.xlu0 %343
      %345 = vrot.lane.b32.xlu0 %v300, 24
      %v346 = vpop.permute.xlu0 %345
      %347 = vrot.lane.b32.xlu0 %v301, 24
      %v348 = vpop.permute.xlu0 %347
      %349 = vrot.lane.b32.xlu0 %v302, 24
      %v350 = vpop.permute.xlu0 %349
      %351 = vrot.lane.b32.xlu0 %v303, 24
      %v352 = vpop.permute.xlu0 %351
      %353 = vrot.lane.b32.xlu0 %v304, 24
      %v354 = vpop.permute.xlu0 %353
      %363 = vrot.lane.b32.xlu0 %v297, 36
      %v364 = vpop.permute.xlu0 %363
      %365 = vrot.lane.b32.xlu0 %v298, 36
      %v366 = vpop.permute.xlu0 %365
      %367 = vrot.lane.b32.xlu0 %v299, 36
      %v368 = vpop.permute.xlu0 %367
      %369 = vrot.lane.b32.xlu0 %v300, 36
      %v370 = vpop.permute.xlu0 %369
      %371 = vrot.lane.b32.xlu0 %v301, 36
      %v372 = vpop.permute.xlu0 %371
      %373 = vrot.lane.b32.xlu0 %v302, 36
      %v374 = vpop.permute.xlu0 %373
      %375 = vrot.lane.b32.xlu0 %v303, 36
      %v376 = vpop.permute.xlu0 %375
      %377 = vrot.lane.b32.xlu0 %v304, 36
      %v378 = vpop.permute.xlu0 %377
      %387 = vrot.lane.b32.xlu0 %v297, 48
      %v388 = vpop.permute.xlu0 %387
      %389 = vrot.lane.b32.xlu0 %v298, 48
      %v390 = vpop.permute.xlu0 %389
      %391 = vrot.lane.b32.xlu0 %v299, 48
      %v392 = vpop.permute.xlu0 %391
      %393 = vrot.lane.b32.xlu0 %v300, 48
      %v394 = vpop.permute.xlu0 %393
      %395 = vrot.lane.b32.xlu0 %v301, 48
      %v396 = vpop.permute.xlu0 %395
      %397 = vrot.lane.b32.xlu0 %v302, 48
      %v398 = vpop.permute.xlu0 %397
      %399 = vrot.lane.b32.xlu0 %v303, 48
      %v400 = vpop.permute.xlu0 %399
      %401 = vrot.lane.b32.xlu0 %v304, 48
      %v402 = vpop.permute.xlu0 %401
      %411 = vrot.lane.b32.xlu0 %v297, 60
      %v412 = vpop.permute.xlu0 %411
      %413 = vrot.lane.b32.xlu0 %v298, 60
      %v414 = vpop.permute.xlu0 %413
      %415 = vrot.lane.b32.xlu0 %v299, 60
      %v416 = vpop.permute.xlu0 %415
      %417 = vrot.lane.b32.xlu0 %v300, 60
      %v418 = vpop.permute.xlu0 %417
      %419 = vrot.lane.b32.xlu0 %v301, 60
      %v420 = vpop.permute.xlu0 %419
      %421 = vrot.lane.b32.xlu0 %v302, 60
      %v422 = vpop.permute.xlu0 %421
      %423 = vrot.lane.b32.xlu0 %v303, 60
      %v424 = vpop.permute.xlu0 %423
      %425 = vrot.lane.b32.xlu0 %v304, 60
      %v426 = vpop.permute.xlu0 %425
      %435 = vrot.lane.b32.xlu0 %v297, 72
      %v436 = vpop.permute.xlu0 %435
      %437 = vrot.lane.b32.xlu0 %v298, 72
      %v438 = vpop.permute.xlu0 %437
      %439 = vrot.lane.b32.xlu0 %v299, 72
      %v440 = vpop.permute.xlu0 %439
      %441 = vrot.lane.b32.xlu0 %v300, 72
      %v442 = vpop.permute.xlu0 %441
      %443 = vrot.lane.b32.xlu0 %v301, 72
      %v444 = vpop.permute.xlu0 %443
      %445 = vrot.lane.b32.xlu0 %v302, 72
      %v446 = vpop.permute.xlu0 %445
      %447 = vrot.lane.b32.xlu0 %v303, 72
      %v448 = vpop.permute.xlu0 %447
      %449 = vrot.lane.b32.xlu0 %v304, 72
      %v450 = vpop.permute.xlu0 %449
      %459 = vrot.lane.b32.xlu0 %v297, 84
      %v460 = vpop.permute.xlu0 %459
      %461 = vrot.lane.b32.xlu0 %v298, 84
      %v462 = vpop.permute.xlu0 %461
      %463 = vrot.lane.b32.xlu0 %v299, 84
      %v464 = vpop.permute.xlu0 %463
      %465 = vrot.lane.b32.xlu0 %v300, 84
      %v466 = vpop.permute.xlu0 %465
      %467 = vrot.lane.b32.xlu0 %v301, 84
      %v468 = vpop.permute.xlu0 %467
      %469 = vrot.lane.b32.xlu0 %v302, 84
      %v470 = vpop.permute.xlu0 %469
      %471 = vrot.lane.b32.xlu0 %v303, 84
      %v472 = vpop.permute.xlu0 %471
      %473 = vrot.lane.b32.xlu0 %v304, 84
      %v474 = vpop.permute.xlu0 %473
      %483 = vrot.lane.b32.xlu0 %v297, 96
      %v484 = vpop.permute.xlu0 %483
      %485 = vrot.lane.b32.xlu0 %v298, 96
      %v486 = vpop.permute.xlu0 %485
      %487 = vrot.lane.b32.xlu0 %v299, 96
      %v488 = vpop.permute.xlu0 %487
      %489 = vrot.lane.b32.xlu0 %v300, 96
      %v490 = vpop.permute.xlu0 %489
      %491 = vrot.lane.b32.xlu0 %v301, 96
      %v492 = vpop.permute.xlu0 %491
      %493 = vrot.lane.b32.xlu0 %v302, 96
      %v494 = vpop.permute.xlu0 %493
      %495 = vrot.lane.b32.xlu0 %v303, 96
      %v496 = vpop.permute.xlu0 %495
      %497 = vrot.lane.b32.xlu0 %v304, 96
      %v498 = vpop.permute.xlu0 %497
      %vm507 = vcmask 97280
      %v508 = vsel %vm507, %v297, %v316
      %v509 = vsel %vm507, %v298, %v318
      %v510 = vsel %vm507, %v299, %v320
      %v511 = vsel %vm507, %v300, %v322
      %v512 = vsel %vm507, %v301, %v324
      %v513 = vsel %vm507, %v302, %v326
      %v514 = vsel %vm507, %v303, %v328
      %v515 = vsel %vm507, %v304, %v330
      %vm516 = vcmask 195584
      %v517 = vsel %vm516, %v508, %v340
      %v518 = vsel %vm516, %v509, %v342
      %v519 = vsel %vm516, %v510, %v344
      %v520 = vsel %vm516, %v511, %v346
      %v521 = vsel %vm516, %v512, %v348
      %v522 = vsel %vm516, %v513, %v350
      %v523 = vsel %vm516, %v514, %v352
      %v524 = vsel %vm516, %v515, %v354
      %vm525 = vcmask 293888
      %v526 = vsel %vm525, %v517, %v364
      %v527 = vsel %vm525, %v518, %v366
      %v528 = vsel %vm525, %v519, %v368
      %v529 = vsel %vm525, %v520, %v370
      %v530 = vsel %vm525, %v521, %v372
      %v531 = vsel %vm525, %v522, %v374
      %v532 = vsel %vm525, %v523, %v376
      %v533 = vsel %vm525, %v524, %v378
      %vm534 = vcmask 392192
      %v535 = vsel %vm534, %v526, %v388
      %v536 = vsel %vm534, %v527, %v390
      %v537 = vsel %vm534, %v528, %v392
      %v538 = vsel %vm534, %v529, %v394
      %v539 = vsel %vm534, %v530, %v396
      %v540 = vsel %vm534, %v531, %v398
      %v541 = vsel %vm534, %v532, %v400
      %v542 = vsel %vm534, %v533, %v402
      %vm543 = vcmask 490496
      %v544 = vsel %vm543, %v535, %v412
      %v545 = vsel %vm543, %v536, %v414
      %v546 = vsel %vm543, %v537, %v416
      %v547 = vsel %vm543, %v538, %v418
      %v548 = vsel %vm543, %v539, %v420
      %v549 = vsel %vm543, %v540, %v422
      %v550 = vsel %vm543, %v541, %v424
      %v551 = vsel %vm543, %v542, %v426
      %vm552 = vcmask 588800
      %v553 = vsel %vm552, %v544, %v436
      %v554 = vsel %vm552, %v545, %v438
      %v555 = vsel %vm552, %v546, %v440
      %v556 = vsel %vm552, %v547, %v442
      %v557 = vsel %vm552, %v548, %v444
      %v558 = vsel %vm552, %v549, %v446
      %v559 = vsel %vm552, %v550, %v448
      %v560 = vsel %vm552, %v551, %v450
      %vm561 = vcmask 687104
      %v562 = vsel %vm561, %v553, %v460
      %v563 = vsel %vm561, %v554, %v462
      %v564 = vsel %vm561, %v555, %v464
      %v565 = vsel %vm561, %v556, %v466
      %v566 = vsel %vm561, %v557, %v468
      %v567 = vsel %vm561, %v558, %v470
      %v568 = vsel %vm561, %v559, %v472
      %v569 = vsel %vm561, %v560, %v474
      %vm570 = vcmask 785408
      %v571 = vsel %vm570, %v562, %v484
      %v572 = vsel %vm570, %v563, %v486
      %v573 = vsel %vm570, %v564, %v488
      %v574 = vsel %vm570, %v565, %v490
      %v575 = vsel %vm570, %v566, %v492
      %v576 = vsel %vm570, %v567, %v494
      %v577 = vsel %vm570, %v568, %v496
      %v578 = vsel %vm570, %v569, %v498
      %vm579 = vcmask 883712
      %v580 = vsel %vm579, %v571, 0.0
      %v581 = vsel %vm579, %v572, 0.0
      %v582 = vsel %vm579, %v573, 0.0
      %v583 = vsel %vm579, %v574, 0.0
      %v584 = vsel %vm579, %v575, 0.0
      %v585 = vsel %vm579, %v576, 0.0
      %v586 = vsel %vm579, %v577, 0.0
      %v587 = vsel %vm579, %v578, 0.0
      %v588 = vlaneseq
      %v589 = vshrl.u32 %v588, 7
      %v590 = vsub.s32 2, %v589
      %v591 = vrot.slane %v305, %v590
      %v592 = vmul.f32 %v591, %v580
      %v593 = vmul.f32 %v591, %v581
      %v594 = vmul.f32 %v591, %v582
      %v595 = vmul.f32 %v591, %v583
      %v596 = vmul.f32 %v591, %v584
      %v597 = vmul.f32 %v591, %v585
      %v598 = vmul.f32 %v591, %v586
      %v599 = vmul.f32 %v591, %v587
      %v600 = vlaneseq
      %v601 = vshrl.u32 %v600, 7
      %v602 = vsub.s32 0, %v601
      %v603 = vrot.slane %v305, %v602
      %v604 = vmul.f32 %v580, %v603
      %v605 = vmul.f32 %v581, %v603
      %v606 = vmul.f32 %v582, %v603
      %v607 = vmul.f32 %v583, %v603
      %v608 = vmul.f32 %v584, %v603
      %v609 = vmul.f32 %v585, %v603
      %v610 = vmul.f32 %v586, %v603
      %v611 = vmul.f32 %v587, %v603
      %v612 = vlaneseq
      %v613 = vshrl.u32 %v612, 7
      %v614 = vsub.s32 1, %v613
      %v615 = vrot.slane %v305, %v614
      %v616 = vadd.f32 %v604, %v615
      %v617 = vadd.f32 %v605, %v615
      %v618 = vadd.f32 %v606, %v615
      %v619 = vadd.f32 %v607, %v615
      %v620 = vadd.f32 %v608, %v615
      %v621 = vadd.f32 %v609, %v615
      %v622 = vadd.f32 %v610, %v615
      %v623 = vadd.f32 %v611, %v615
      %v624 = vand.u32 2147483647, %v616
      %vm625 = vcmp.le.f32.partialorder %v624, 0.7853982
      %vm626 = vcmp.lt.s32.totalorder %v616, 0
      %v627 = vand.u32 %v616, 2139095040
      %v628 = vshrl.u32 %v627, 23
      %v629 = vsub.s32 %v628, 127
      %v630 = vand.u32 2147483647, %v616
      %v631 = vand.u32 %v630, 8388607
      %v632 = vor.u32 %v631, 8388608
      %v633 = vsub.s32 0, %v632
      %v634 = vadd.s32 %v629, 1
      %vm635 = vcmp.gt.s32.totalorder %v634, 0
      %v636 = vsel %vm635, %v634, 0
      %v637 = vshrl.u32 %v636, 5
      %v638 = vand.u32 %v636, 31
      %v639 = vsub.s32 32, %v638
      %v640 = vshrl.u32 683565275, %v639
      %v641 = vshll.u32 683565275, %v638
      %v642 = vshrl.u32 2475754826, %v639
      %v643 = vor.u32 %v641, %v642
      %v644 = vshll.u32 2475754826, %v638
      %v645 = vshrl.u32 2131351028, %v639
      %v646 = vor.u32 %v644, %v645
      %v647 = vshll.u32 2131351028, %v638
      %v648 = vshrl.u32 2102212464, %v639
      %v649 = vor.u32 %v647, %v648
      %v650 = vshll.u32 2102212464, %v638
      %v651 = vshrl.u32 920167782, %v639
      %v652 = vor.u32 %v650, %v651
      %v653 = vshll.u32 920167782, %v638
      %v654 = vshrl.u32 1326507024, %v639
      %v655 = vor.u32 %v653, %v654
      %vm656 = vcmp.lt.s32.totalorder %v637, 1
      %vm657 = vcmp.lt.s32.totalorder %v637, 2
      %vm658 = vcmp.lt.s32.totalorder %v637, 3
      %vm659 = vcmp.lt.s32.totalorder %v637, 4
      %v660 = vsel %vm656, %v640, %v643
      %v661 = vsel %vm659, %v649, 2102212464
      %v662 = vsel %vm658, %v646, %v661
      %v663 = vsel %vm657, %v660, %v662
      %v664 = vsel %vm656, %v643, %v646
      %v665 = vsel %vm659, %v652, 920167782
      %v666 = vsel %vm658, %v649, %v665
      %v667 = vsel %vm657, %v664, %v666
      %v668 = vsel %vm656, %v646, %v649
      %v669 = vsel %vm659, %v655, 1326507024
      %v670 = vsel %vm658, %v652, %v669
      %v671 = vsel %vm657, %v668, %v670
      %v672 = vshll.u32 %v632, 8
      %v673 = vmul.u32.u64.compose %v672, %v671
      %v674 = vextract.low.u32 %v673
      %v675 = vextract.high.u32 %v673
      %v676 = vmul.u32.u64.compose %v672, %v667
      %v677 = vextract.low.u32 %v676
      %v678 = vextract.high.u32 %v676
      %v679 = vmul.u32 %v672, %v663
      %v680 = vadd.s32 %v675, %v677
      %vm681 = vc.u32 %v675, %v677
      %v682 = vadd.s32 %v678, 1
      %v683 = vsel %vm681, %v682, %v678
      %v684 = vadd.s32 %v679, %v683
      %v685 = vadd.s32 %v684, 536870912
      %v686 = vshrl.u32 %v685, 30
      %v687 = vshll.u32 %v686, 30
      %v688 = vsub.s32 %v684, %v687
      %vm689 = vcmp.lt.s32.totalorder %v688, 0
      %v690 = vsub.s32 0, %v688
      %v691 = vsel %vm689, %v690, %v688
      %v692 = vclz %v691
      %v693 = vsub.s32 %v692, 2
      %vm694 = vcmp.gt.s32.totalorder 0, %v693
      %v695 = vsel %vm694, 0, %v693
      %v696 = vsub.s32 32, %v695
      %v697 = vshll.u32 %v688, %v695
      %v698 = vshrl.u32 %v680, %v696
      %v699 = vor.u32 %v697, %v698
      %v700 = vsub.s32 4294967266, %v695
      %v701 = vadd.s32 %v700, 127
      %v702 = vshll.u32 %v701, 23
      %v703 = vor.u32 4788187, %v702
      %v704 = vand.u32 2147483647, %v703
      %v706 = vcvt.s32.f32 %v699
      %v707 = vmul.f32 %v706, %v704
      %v708 = vxor.u32 %v707, 2147483648
      %v709 = vsel %vm626, %v708, %v707
      %v710 = vsub.s32 4, %v686
      %v711 = vsel %vm626, %v710, %v686
      %v712 = vsel %vm625, %v616, %v709
      %v713 = vsel %vm625, 0, %v711
      %v714 = vcosq.f32.pop %v712
      %v715 = vsinq.f32.pop %v712
      %vm716 = vweird.f32 %v616
      %v717 = vadd.s32 %v713, 3
      %v718 = vand.u32 %v717, 3
      %vm719 = vcmp.lt.s32.totalorder %v718, 2
      %vm720 = vcmp.eq.s32.totalorder %v718, 0
      %v721 = vxor.u32 %v715, 2147483648
      %v722 = vsel %vm720, %v714, %v721
      %vm723 = vcmp.eq.s32.totalorder %v718, 2
      %v724 = vxor.u32 %v714, 2147483648
      %v725 = vsel %vm723, %v724, %v715
      %v726 = vsel %vm719, %v722, %v725
      %v727 = vsel %vm716, nan, %v726
      %v728 = vand.u32 2147483647, %v617
      %vm729 = vcmp.le.f32.partialorder %v728, 0.7853982
      %vm730 = vcmp.lt.s32.totalorder %v617, 0
      %v731 = vand.u32 %v617, 2139095040
      %v732 = vshrl.u32 %v731, 23
      %v733 = vsub.s32 %v732, 127
      %v734 = vand.u32 2147483647, %v617
      %v735 = vand.u32 %v734, 8388607
      %v736 = vor.u32 %v735, 8388608
      %v737 = vsub.s32 0, %v736
      %v738 = vadd.s32 %v733, 1
      %vm739 = vcmp.gt.s32.totalorder %v738, 0
      %v740 = vsel %vm739, %v738, 0
      %v741 = vshrl.u32 %v740, 5
      %v742 = vand.u32 %v740, 31
      %v743 = vsub.s32 32, %v742
      %v744 = vshrl.u32 683565275, %v743
      %v745 = vshll.u32 683565275, %v742
      %v746 = vshrl.u32 2475754826, %v743
      %v747 = vor.u32 %v745, %v746
      %v748 = vshll.u32 2475754826, %v742
      %v749 = vshrl.u32 2131351028, %v743
      %v750 = vor.u32 %v748, %v749
      %v751 = vshll.u32 2131351028, %v742
      %v752 = vshrl.u32 2102212464, %v743
      %v753 = vor.u32 %v751, %v752
      %v754 = vshll.u32 2102212464, %v742
      %v755 = vshrl.u32 920167782, %v743
      %v756 = vor.u32 %v754, %v755
      %v757 = vshll.u32 920167782, %v742
      %v758 = vshrl.u32 1326507024, %v743
      %v759 = vor.u32 %v757, %v758
      %vm760 = vcmp.lt.s32.totalorder %v741, 1
      %vm761 = vcmp.lt.s32.totalorder %v741, 2
      %vm762 = vcmp.lt.s32.totalorder %v741, 3
      %vm763 = vcmp.lt.s32.totalorder %v741, 4
      %v764 = vsel %vm760, %v744, %v747
      %v765 = vsel %vm763, %v753, 2102212464
      %v766 = vsel %vm762, %v750, %v765
      %v767 = vsel %vm761, %v764, %v766
      %v768 = vsel %vm760, %v747, %v750
      %v769 = vsel %vm763, %v756, 920167782
      %v770 = vsel %vm762, %v753, %v769
      %v771 = vsel %vm761, %v768, %v770
      %v772 = vsel %vm760, %v750, %v753
      %v773 = vsel %vm763, %v759, 1326507024
      %v774 = vsel %vm762, %v756, %v773
      %v775 = vsel %vm761, %v772, %v774
      %v776 = vshll.u32 %v736, 8
      %v777 = vmul.u32.u64.compose %v776, %v775
      %v778 = vextract.low.u32 %v777
      %v779 = vextract.high.u32 %v777
      %v780 = vmul.u32.u64.compose %v776, %v771
      %v781 = vextract.low.u32 %v780
      %v782 = vextract.high.u32 %v780
      %v783 = vmul.u32 %v776, %v767
      %v784 = vadd.s32 %v779, %v781
      %vm785 = vc.u32 %v779, %v781
      %v786 = vadd.s32 %v782, 1
      %v787 = vsel %vm785, %v786, %v782
      %v788 = vadd.s32 %v783, %v787
      %v789 = vadd.s32 %v788, 536870912
      %v790 = vshrl.u32 %v789, 30
      %v791 = vshll.u32 %v790, 30
      %v792 = vsub.s32 %v788, %v791
      %vm793 = vcmp.lt.s32.totalorder %v792, 0
      %v794 = vsub.s32 0, %v792
      %v795 = vsel %vm793, %v794, %v792
      %v796 = vclz %v795
      %v797 = vsub.s32 %v796, 2
      %vm798 = vcmp.gt.s32.totalorder 0, %v797
      %v799 = vsel %vm798, 0, %v797
      %v800 = vsub.s32 32, %v799
      %v801 = vshll.u32 %v792, %v799
      %v802 = vshrl.u32 %v784, %v800
      %v803 = vor.u32 %v801, %v802
      %v804 = vsub.s32 4294967266, %v799
      %v805 = vadd.s32 %v804, 127
      %v806 = vshll.u32 %v805, 23
      %v807 = vor.u32 4788187, %v806
      %v808 = vand.u32 2147483647, %v807
      %v810 = vcvt.s32.f32 %v803
      %v811 = vmul.f32 %v810, %v808
      %v812 = vxor.u32 %v811, 2147483648
      %v813 = vsel %vm730, %v812, %v811
      %v814 = vsub.s32 4, %v790
      %v815 = vsel %vm730, %v814, %v790
      %v816 = vsel %vm729, %v617, %v813
      %v817 = vsel %vm729, 0, %v815
      %v818 = vcosq.f32.pop %v816
      %v819 = vsinq.f32.pop %v816
      %vm820 = vweird.f32 %v617
      %v821 = vadd.s32 %v817, 3
      %v822 = vand.u32 %v821, 3
      %vm823 = vcmp.lt.s32.totalorder %v822, 2
      %vm824 = vcmp.eq.s32.totalorder %v822, 0
      %v825 = vxor.u32 %v819, 2147483648
      %v826 = vsel %vm824, %v818, %v825
      %vm827 = vcmp.eq.s32.totalorder %v822, 2
      %v828 = vxor.u32 %v818, 2147483648
      %v829 = vsel %vm827, %v828, %v819
      %v830 = vsel %vm823, %v826, %v829
      %v831 = vsel %vm820, nan, %v830
      %v832 = vand.u32 2147483647, %v618
      %vm833 = vcmp.le.f32.partialorder %v832, 0.7853982
      %vm834 = vcmp.lt.s32.totalorder %v618, 0
      %v835 = vand.u32 %v618, 2139095040
      %v836 = vshrl.u32 %v835, 23
      %v837 = vsub.s32 %v836, 127
      %v838 = vand.u32 2147483647, %v618
      %v839 = vand.u32 %v838, 8388607
      %v840 = vor.u32 %v839, 8388608
      %v841 = vsub.s32 0, %v840
      %v842 = vadd.s32 %v837, 1
      %vm843 = vcmp.gt.s32.totalorder %v842, 0
      %v844 = vsel %vm843, %v842, 0
      %v845 = vshrl.u32 %v844, 5
      %v846 = vand.u32 %v844, 31
      %v847 = vsub.s32 32, %v846
      %v848 = vshrl.u32 683565275, %v847
      %v849 = vshll.u32 683565275, %v846
      %v850 = vshrl.u32 2475754826, %v847
      %v851 = vor.u32 %v849, %v850
      %v852 = vshll.u32 2475754826, %v846
      %v853 = vshrl.u32 2131351028, %v847
      %v854 = vor.u32 %v852, %v853
      %v855 = vshll.u32 2131351028, %v846
      %v856 = vshrl.u32 2102212464, %v847
      %v857 = vor.u32 %v855, %v856
      %v858 = vshll.u32 2102212464, %v846
      %v859 = vshrl.u32 920167782, %v847
      %v860 = vor.u32 %v858, %v859
      %v861 = vshll.u32 920167782, %v846
      %v862 = vshrl.u32 1326507024, %v847
      %v863 = vor.u32 %v861, %v862
      %vm864 = vcmp.lt.s32.totalorder %v845, 1
      %vm865 = vcmp.lt.s32.totalorder %v845, 2
      %vm866 = vcmp.lt.s32.totalorder %v845, 3
      %vm867 = vcmp.lt.s32.totalorder %v845, 4
      %v868 = vsel %vm864, %v848, %v851
      %v869 = vsel %vm867, %v857, 2102212464
      %v870 = vsel %vm866, %v854, %v869
      %v871 = vsel %vm865, %v868, %v870
      %v872 = vsel %vm864, %v851, %v854
      %v873 = vsel %vm867, %v860, 920167782
      %v874 = vsel %vm866, %v857, %v873
      %v875 = vsel %vm865, %v872, %v874
      %v876 = vsel %vm864, %v854, %v857
      %v877 = vsel %vm867, %v863, 1326507024
      %v878 = vsel %vm866, %v860, %v877
      %v879 = vsel %vm865, %v876, %v878
      %v880 = vshll.u32 %v840, 8
      %v881 = vmul.u32.u64.compose %v880, %v879
      %v882 = vextract.low.u32 %v881
      %v883 = vextract.high.u32 %v881
      %v884 = vmul.u32.u64.compose %v880, %v875
      %v885 = vextract.low.u32 %v884
      %v886 = vextract.high.u32 %v884
      %v887 = vmul.u32 %v880, %v871
      %v888 = vadd.s32 %v883, %v885
      %vm889 = vc.u32 %v883, %v885
      %v890 = vadd.s32 %v886, 1
      %v891 = vsel %vm889, %v890, %v886
      %v892 = vadd.s32 %v887, %v891
      %v893 = vadd.s32 %v892, 536870912
      %v894 = vshrl.u32 %v893, 30
      %v895 = vshll.u32 %v894, 30
      %v896 = vsub.s32 %v892, %v895
      %vm897 = vcmp.lt.s32.totalorder %v896, 0
      %v898 = vsub.s32 0, %v896
      %v899 = vsel %vm897, %v898, %v896
      %v900 = vclz %v899
      %v901 = vsub.s32 %v900, 2
      %vm902 = vcmp.gt.s32.totalorder 0, %v901
      %v903 = vsel %vm902, 0, %v901
      %v904 = vsub.s32 32, %v903
      %v905 = vshll.u32 %v896, %v903
      %v906 = vshrl.u32 %v888, %v904
      %v907 = vor.u32 %v905, %v906
      %v908 = vsub.s32 4294967266, %v903
      %v909 = vadd.s32 %v908, 127
      %v910 = vshll.u32 %v909, 23
      %v911 = vor.u32 4788187, %v910
      %v912 = vand.u32 2147483647, %v911
      %v914 = vcvt.s32.f32 %v907
      %v915 = vmul.f32 %v914, %v912
      %v916 = vxor.u32 %v915, 2147483648
      %v917 = vsel %vm834, %v916, %v915
      %v918 = vsub.s32 4, %v894
      %v919 = vsel %vm834, %v918, %v894
      %v920 = vsel %vm833, %v618, %v917
      %v921 = vsel %vm833, 0, %v919
      %v922 = vcosq.f32.pop %v920
      %v923 = vsinq.f32.pop %v920
      %vm924 = vweird.f32 %v618
      %v925 = vadd.s32 %v921, 3
      %v926 = vand.u32 %v925, 3
      %vm927 = vcmp.lt.s32.totalorder %v926, 2
      %vm928 = vcmp.eq.s32.totalorder %v926, 0
      %v929 = vxor.u32 %v923, 2147483648
      %v930 = vsel %vm928, %v922, %v929
      %vm931 = vcmp.eq.s32.totalorder %v926, 2
      %v932 = vxor.u32 %v922, 2147483648
      %v933 = vsel %vm931, %v932, %v923
      %v934 = vsel %vm927, %v930, %v933
      %v935 = vsel %vm924, nan, %v934
      %v936 = vand.u32 2147483647, %v619
      %vm937 = vcmp.le.f32.partialorder %v936, 0.7853982
      %vm938 = vcmp.lt.s32.totalorder %v619, 0
      %v939 = vand.u32 %v619, 2139095040
      %v940 = vshrl.u32 %v939, 23
      %v941 = vsub.s32 %v940, 127
      %v942 = vand.u32 2147483647, %v619
      %v943 = vand.u32 %v942, 8388607
      %v944 = vor.u32 %v943, 8388608
      %v945 = vsub.s32 0, %v944
      %v946 = vadd.s32 %v941, 1
      %vm947 = vcmp.gt.s32.totalorder %v946, 0
      %v948 = vsel %vm947, %v946, 0
      %v949 = vshrl.u32 %v948, 5
      %v950 = vand.u32 %v948, 31
      %v951 = vsub.s32 32, %v950
      %v952 = vshrl.u32 683565275, %v951
      %v953 = vshll.u32 683565275, %v950
      %v954 = vshrl.u32 2475754826, %v951
      %v955 = vor.u32 %v953, %v954
      %v956 = vshll.u32 2475754826, %v950
      %v957 = vshrl.u32 2131351028, %v951
      %v958 = vor.u32 %v956, %v957
      %v959 = vshll.u32 2131351028, %v950
      %v960 = vshrl.u32 2102212464, %v951
      %v961 = vor.u32 %v959, %v960
      %v962 = vshll.u32 2102212464, %v950
      %v963 = vshrl.u32 920167782, %v951
      %v964 = vor.u32 %v962, %v963
      %v965 = vshll.u32 920167782, %v950
      %v966 = vshrl.u32 1326507024, %v951
      %v967 = vor.u32 %v965, %v966
      %vm968 = vcmp.lt.s32.totalorder %v949, 1
      %vm969 = vcmp.lt.s32.totalorder %v949, 2
      %vm970 = vcmp.lt.s32.totalorder %v949, 3
      %vm971 = vcmp.lt.s32.totalorder %v949, 4
      %v972 = vsel %vm968, %v952, %v955
      %v973 = vsel %vm971, %v961, 2102212464
      %v974 = vsel %vm970, %v958, %v973
      %v975 = vsel %vm969, %v972, %v974
      %v976 = vsel %vm968, %v955, %v958
      %v977 = vsel %vm971, %v964, 920167782
      %v978 = vsel %vm970, %v961, %v977
      %v979 = vsel %vm969, %v976, %v978
      %v980 = vsel %vm968, %v958, %v961
      %v981 = vsel %vm971, %v967, 1326507024
      %v982 = vsel %vm970, %v964, %v981
      %v983 = vsel %vm969, %v980, %v982
      %v984 = vshll.u32 %v944, 8
      %v985 = vmul.u32.u64.compose %v984, %v983
      %v986 = vextract.low.u32 %v985
      %v987 = vextract.high.u32 %v985
      %v988 = vmul.u32.u64.compose %v984, %v979
      %v989 = vextract.low.u32 %v988
      %v990 = vextract.high.u32 %v988
      %v991 = vmul.u32 %v984, %v975
      %v992 = vadd.s32 %v987, %v989
      %vm993 = vc.u32 %v987, %v989
      %v994 = vadd.s32 %v990, 1
      %v995 = vsel %vm993, %v994, %v990
      %v996 = vadd.s32 %v991, %v995
      %v997 = vadd.s32 %v996, 536870912
      %v998 = vshrl.u32 %v997, 30
      %v999 = vshll.u32 %v998, 30
      %v1000 = vsub.s32 %v996, %v999
      %vm1001 = vcmp.lt.s32.totalorder %v1000, 0
      %v1002 = vsub.s32 0, %v1000
      %v1003 = vsel %vm1001, %v1002, %v1000
      %v1004 = vclz %v1003
      %v1005 = vsub.s32 %v1004, 2
      %vm1006 = vcmp.gt.s32.totalorder 0, %v1005
      %v1007 = vsel %vm1006, 0, %v1005
      %v1008 = vsub.s32 32, %v1007
      %v1009 = vshll.u32 %v1000, %v1007
      %v1010 = vshrl.u32 %v992, %v1008
      %v1011 = vor.u32 %v1009, %v1010
      %v1012 = vsub.s32 4294967266, %v1007
      %v1013 = vadd.s32 %v1012, 127
      %v1014 = vshll.u32 %v1013, 23
      %v1015 = vor.u32 4788187, %v1014
      %v1016 = vand.u32 2147483647, %v1015
      %v1018 = vcvt.s32.f32 %v1011
      %v1019 = vmul.f32 %v1018, %v1016
      %v1020 = vxor.u32 %v1019, 2147483648
      %v1021 = vsel %vm938, %v1020, %v1019
      %v1022 = vsub.s32 4, %v998
      %v1023 = vsel %vm938, %v1022, %v998
      %v1024 = vsel %vm937, %v619, %v1021
      %v1025 = vsel %vm937, 0, %v1023
      %v1026 = vcosq.f32.pop %v1024
      %v1027 = vsinq.f32.pop %v1024
      %vm1028 = vweird.f32 %v619
      %v1029 = vadd.s32 %v1025, 3
      %v1030 = vand.u32 %v1029, 3
      %vm1031 = vcmp.lt.s32.totalorder %v1030, 2
      %vm1032 = vcmp.eq.s32.totalorder %v1030, 0
      %v1033 = vxor.u32 %v1027, 2147483648
      %v1034 = vsel %vm1032, %v1026, %v1033
      %vm1035 = vcmp.eq.s32.totalorder %v1030, 2
      %v1036 = vxor.u32 %v1026, 2147483648
      %v1037 = vsel %vm1035, %v1036, %v1027
      %v1038 = vsel %vm1031, %v1034, %v1037
      %v1039 = vsel %vm1028, nan, %v1038
      %v1040 = vand.u32 2147483647, %v620
      %vm1041 = vcmp.le.f32.partialorder %v1040, 0.7853982
      %vm1042 = vcmp.lt.s32.totalorder %v620, 0
      %v1043 = vand.u32 %v620, 2139095040
      %v1044 = vshrl.u32 %v1043, 23
      %v1045 = vsub.s32 %v1044, 127
      %v1046 = vand.u32 2147483647, %v620
      %v1047 = vand.u32 %v1046, 8388607
      %v1048 = vor.u32 %v1047, 8388608
      %v1049 = vsub.s32 0, %v1048
      %v1050 = vadd.s32 %v1045, 1
      %vm1051 = vcmp.gt.s32.totalorder %v1050, 0
      %v1052 = vsel %vm1051, %v1050, 0
      %v1053 = vshrl.u32 %v1052, 5
      %v1054 = vand.u32 %v1052, 31
      %v1055 = vsub.s32 32, %v1054
      %v1056 = vshrl.u32 683565275, %v1055
      %v1057 = vshll.u32 683565275, %v1054
      %v1058 = vshrl.u32 2475754826, %v1055
      %v1059 = vor.u32 %v1057, %v1058
      %v1060 = vshll.u32 2475754826, %v1054
      %v1061 = vshrl.u32 2131351028, %v1055
      %v1062 = vor.u32 %v1060, %v1061
      %v1063 = vshll.u32 2131351028, %v1054
      %v1064 = vshrl.u32 2102212464, %v1055
      %v1065 = vor.u32 %v1063, %v1064
      %v1066 = vshll.u32 2102212464, %v1054
      %v1067 = vshrl.u32 920167782, %v1055
      %v1068 = vor.u32 %v1066, %v1067
      %v1069 = vshll.u32 920167782, %v1054
      %v1070 = vshrl.u32 1326507024, %v1055
      %v1071 = vor.u32 %v1069, %v1070
      %vm1072 = vcmp.lt.s32.totalorder %v1053, 1
      %vm1073 = vcmp.lt.s32.totalorder %v1053, 2
      %vm1074 = vcmp.lt.s32.totalorder %v1053, 3
      %vm1075 = vcmp.lt.s32.totalorder %v1053, 4
      %v1076 = vsel %vm1072, %v1056, %v1059
      %v1077 = vsel %vm1075, %v1065, 2102212464
      %v1078 = vsel %vm1074, %v1062, %v1077
      %v1079 = vsel %vm1073, %v1076, %v1078
      %v1080 = vsel %vm1072, %v1059, %v1062
      %v1081 = vsel %vm1075, %v1068, 920167782
      %v1082 = vsel %vm1074, %v1065, %v1081
      %v1083 = vsel %vm1073, %v1080, %v1082
      %v1084 = vsel %vm1072, %v1062, %v1065
      %v1085 = vsel %vm1075, %v1071, 1326507024
      %v1086 = vsel %vm1074, %v1068, %v1085
      %v1087 = vsel %vm1073, %v1084, %v1086
      %v1088 = vshll.u32 %v1048, 8
      %v1089 = vmul.u32.u64.compose %v1088, %v1087
      %v1090 = vextract.low.u32 %v1089
      %v1091 = vextract.high.u32 %v1089
      %v1092 = vmul.u32.u64.compose %v1088, %v1083
      %v1093 = vextract.low.u32 %v1092
      %v1094 = vextract.high.u32 %v1092
      %v1095 = vmul.u32 %v1088, %v1079
      %v1096 = vadd.s32 %v1091, %v1093
      %vm1097 = vc.u32 %v1091, %v1093
      %v1098 = vadd.s32 %v1094, 1
      %v1099 = vsel %vm1097, %v1098, %v1094
      %v1100 = vadd.s32 %v1095, %v1099
      %v1101 = vadd.s32 %v1100, 536870912
      %v1102 = vshrl.u32 %v1101, 30
      %v1103 = vshll.u32 %v1102, 30
      %v1104 = vsub.s32 %v1100, %v1103
      %vm1105 = vcmp.lt.s32.totalorder %v1104, 0
      %v1106 = vsub.s32 0, %v1104
      %v1107 = vsel %vm1105, %v1106, %v1104
      %v1108 = vclz %v1107
      %v1109 = vsub.s32 %v1108, 2
      %vm1110 = vcmp.gt.s32.totalorder 0, %v1109
      %v1111 = vsel %vm1110, 0, %v1109
      %v1112 = vsub.s32 32, %v1111
      %v1113 = vshll.u32 %v1104, %v1111
      %v1114 = vshrl.u32 %v1096, %v1112
      %v1115 = vor.u32 %v1113, %v1114
      %v1116 = vsub.s32 4294967266, %v1111
      %v1117 = vadd.s32 %v1116, 127
      %v1118 = vshll.u32 %v1117, 23
      %v1119 = vor.u32 4788187, %v1118
      %v1120 = vand.u32 2147483647, %v1119
      %v1122 = vcvt.s32.f32 %v1115
      %v1123 = vmul.f32 %v1122, %v1120
      %v1124 = vxor.u32 %v1123, 2147483648
      %v1125 = vsel %vm1042, %v1124, %v1123
      %v1126 = vsub.s32 4, %v1102
      %v1127 = vsel %vm1042, %v1126, %v1102
      %v1128 = vsel %vm1041, %v620, %v1125
      %v1129 = vsel %vm1041, 0, %v1127
      %v1130 = vcosq.f32.pop %v1128
      %v1131 = vsinq.f32.pop %v1128
      %vm1132 = vweird.f32 %v620
      %v1133 = vadd.s32 %v1129, 3
      %v1134 = vand.u32 %v1133, 3
      %vm1135 = vcmp.lt.s32.totalorder %v1134, 2
      %vm1136 = vcmp.eq.s32.totalorder %v1134, 0
      %v1137 = vxor.u32 %v1131, 2147483648
      %v1138 = vsel %vm1136, %v1130, %v1137
      %vm1139 = vcmp.eq.s32.totalorder %v1134, 2
      %v1140 = vxor.u32 %v1130, 2147483648
      %v1141 = vsel %vm1139, %v1140, %v1131
      %v1142 = vsel %vm1135, %v1138, %v1141
      %v1143 = vsel %vm1132, nan, %v1142
      %v1144 = vand.u32 2147483647, %v621
      %vm1145 = vcmp.le.f32.partialorder %v1144, 0.7853982
      %vm1146 = vcmp.lt.s32.totalorder %v621, 0
      %v1147 = vand.u32 %v621, 2139095040
      %v1148 = vshrl.u32 %v1147, 23
      %v1149 = vsub.s32 %v1148, 127
      %v1150 = vand.u32 2147483647, %v621
      %v1151 = vand.u32 %v1150, 8388607
      %v1152 = vor.u32 %v1151, 8388608
      %v1153 = vsub.s32 0, %v1152
      %v1154 = vadd.s32 %v1149, 1
      %vm1155 = vcmp.gt.s32.totalorder %v1154, 0
      %v1156 = vsel %vm1155, %v1154, 0
      %v1157 = vshrl.u32 %v1156, 5
      %v1158 = vand.u32 %v1156, 31
      %v1159 = vsub.s32 32, %v1158
      %v1160 = vshrl.u32 683565275, %v1159
      %v1161 = vshll.u32 683565275, %v1158
      %v1162 = vshrl.u32 2475754826, %v1159
      %v1163 = vor.u32 %v1161, %v1162
      %v1164 = vshll.u32 2475754826, %v1158
      %v1165 = vshrl.u32 2131351028, %v1159
      %v1166 = vor.u32 %v1164, %v1165
      %v1167 = vshll.u32 2131351028, %v1158
      %v1168 = vshrl.u32 2102212464, %v1159
      %v1169 = vor.u32 %v1167, %v1168
      %v1170 = vshll.u32 2102212464, %v1158
      %v1171 = vshrl.u32 920167782, %v1159
      %v1172 = vor.u32 %v1170, %v1171
      %v1173 = vshll.u32 920167782, %v1158
      %v1174 = vshrl.u32 1326507024, %v1159
      %v1175 = vor.u32 %v1173, %v1174
      %vm1176 = vcmp.lt.s32.totalorder %v1157, 1
      %vm1177 = vcmp.lt.s32.totalorder %v1157, 2
      %vm1178 = vcmp.lt.s32.totalorder %v1157, 3
      %vm1179 = vcmp.lt.s32.totalorder %v1157, 4
      %v1180 = vsel %vm1176, %v1160, %v1163
      %v1181 = vsel %vm1179, %v1169, 2102212464
      %v1182 = vsel %vm1178, %v1166, %v1181
      %v1183 = vsel %vm1177, %v1180, %v1182
      %v1184 = vsel %vm1176, %v1163, %v1166
      %v1185 = vsel %vm1179, %v1172, 920167782
      %v1186 = vsel %vm1178, %v1169, %v1185
      %v1187 = vsel %vm1177, %v1184, %v1186
      %v1188 = vsel %vm1176, %v1166, %v1169
      %v1189 = vsel %vm1179, %v1175, 1326507024
      %v1190 = vsel %vm1178, %v1172, %v1189
      %v1191 = vsel %vm1177, %v1188, %v1190
      %v1192 = vshll.u32 %v1152, 8
      %v1193 = vmul.u32.u64.compose %v1192, %v1191
      %v1194 = vextract.low.u32 %v1193
      %v1195 = vextract.high.u32 %v1193
      %v1196 = vmul.u32.u64.compose %v1192, %v1187
      %v1197 = vextract.low.u32 %v1196
      %v1198 = vextract.high.u32 %v1196
      %v1199 = vmul.u32 %v1192, %v1183
      %v1200 = vadd.s32 %v1195, %v1197
      %vm1201 = vc.u32 %v1195, %v1197
      %v1202 = vadd.s32 %v1198, 1
      %v1203 = vsel %vm1201, %v1202, %v1198
      %v1204 = vadd.s32 %v1199, %v1203
      %v1205 = vadd.s32 %v1204, 536870912
      %v1206 = vshrl.u32 %v1205, 30
      %v1207 = vshll.u32 %v1206, 30
      %v1208 = vsub.s32 %v1204, %v1207
      %vm1209 = vcmp.lt.s32.totalorder %v1208, 0
      %v1210 = vsub.s32 0, %v1208
      %v1211 = vsel %vm1209, %v1210, %v1208
      %v1212 = vclz %v1211
      %v1213 = vsub.s32 %v1212, 2
      %vm1214 = vcmp.gt.s32.totalorder 0, %v1213
      %v1215 = vsel %vm1214, 0, %v1213
      %v1216 = vsub.s32 32, %v1215
      %v1217 = vshll.u32 %v1208, %v1215
      %v1218 = vshrl.u32 %v1200, %v1216
      %v1219 = vor.u32 %v1217, %v1218
      %v1220 = vsub.s32 4294967266, %v1215
      %v1221 = vadd.s32 %v1220, 127
      %v1222 = vshll.u32 %v1221, 23
      %v1223 = vor.u32 4788187, %v1222
      %v1224 = vand.u32 2147483647, %v1223
      %v1226 = vcvt.s32.f32 %v1219
      %v1227 = vmul.f32 %v1226, %v1224
      %v1228 = vxor.u32 %v1227, 2147483648
      %v1229 = vsel %vm1146, %v1228, %v1227
      %v1230 = vsub.s32 4, %v1206
      %v1231 = vsel %vm1146, %v1230, %v1206
      %v1232 = vsel %vm1145, %v621, %v1229
      %v1233 = vsel %vm1145, 0, %v1231
      %v1234 = vcosq.f32.pop %v1232
      %v1235 = vsinq.f32.pop %v1232
      %vm1236 = vweird.f32 %v621
      %v1237 = vadd.s32 %v1233, 3
      %v1238 = vand.u32 %v1237, 3
      %vm1239 = vcmp.lt.s32.totalorder %v1238, 2
      %vm1240 = vcmp.eq.s32.totalorder %v1238, 0
      %v1241 = vxor.u32 %v1235, 2147483648
      %v1242 = vsel %vm1240, %v1234, %v1241
      %vm1243 = vcmp.eq.s32.totalorder %v1238, 2
      %v1244 = vxor.u32 %v1234, 2147483648
      %v1245 = vsel %vm1243, %v1244, %v1235
      %v1246 = vsel %vm1239, %v1242, %v1245
      %v1247 = vsel %vm1236, nan, %v1246
      %v1248 = vand.u32 2147483647, %v622
      %vm1249 = vcmp.le.f32.partialorder %v1248, 0.7853982
      %vm1250 = vcmp.lt.s32.totalorder %v622, 0
      %v1251 = vand.u32 %v622, 2139095040
      %v1252 = vshrl.u32 %v1251, 23
      %v1253 = vsub.s32 %v1252, 127
      %v1254 = vand.u32 2147483647, %v622
      %v1255 = vand.u32 %v1254, 8388607
      %v1256 = vor.u32 %v1255, 8388608
      %v1257 = vsub.s32 0, %v1256
      %v1258 = vadd.s32 %v1253, 1
      %vm1259 = vcmp.gt.s32.totalorder %v1258, 0
      %v1260 = vsel %vm1259, %v1258, 0
      %v1261 = vshrl.u32 %v1260, 5
      %v1262 = vand.u32 %v1260, 31
      %v1263 = vsub.s32 32, %v1262
      %v1264 = vshrl.u32 683565275, %v1263
      %v1265 = vshll.u32 683565275, %v1262
      %v1266 = vshrl.u32 2475754826, %v1263
      %v1267 = vor.u32 %v1265, %v1266
      %v1268 = vshll.u32 2475754826, %v1262
      %v1269 = vshrl.u32 2131351028, %v1263
      %v1270 = vor.u32 %v1268, %v1269
      %v1271 = vshll.u32 2131351028, %v1262
      %v1272 = vshrl.u32 2102212464, %v1263
      %v1273 = vor.u32 %v1271, %v1272
      %v1274 = vshll.u32 2102212464, %v1262
      %v1275 = vshrl.u32 920167782, %v1263
      %v1276 = vor.u32 %v1274, %v1275
      %v1277 = vshll.u32 920167782, %v1262
      %v1278 = vshrl.u32 1326507024, %v1263
      %v1279 = vor.u32 %v1277, %v1278
      %vm1280 = vcmp.lt.s32.totalorder %v1261, 1
      %vm1281 = vcmp.lt.s32.totalorder %v1261, 2
      %vm1282 = vcmp.lt.s32.totalorder %v1261, 3
      %vm1283 = vcmp.lt.s32.totalorder %v1261, 4
      %v1284 = vsel %vm1280, %v1264, %v1267
      %v1285 = vsel %vm1283, %v1273, 2102212464
      %v1286 = vsel %vm1282, %v1270, %v1285
      %v1287 = vsel %vm1281, %v1284, %v1286
      %v1288 = vsel %vm1280, %v1267, %v1270
      %v1289 = vsel %vm1283, %v1276, 920167782
      %v1290 = vsel %vm1282, %v1273, %v1289
      %v1291 = vsel %vm1281, %v1288, %v1290
      %v1292 = vsel %vm1280, %v1270, %v1273
      %v1293 = vsel %vm1283, %v1279, 1326507024
      %v1294 = vsel %vm1282, %v1276, %v1293
      %v1295 = vsel %vm1281, %v1292, %v1294
      %v1296 = vshll.u32 %v1256, 8
      %v1297 = vmul.u32.u64.compose %v1296, %v1295
      %v1298 = vextract.low.u32 %v1297
      %v1299 = vextract.high.u32 %v1297
      %v1300 = vmul.u32.u64.compose %v1296, %v1291
      %v1301 = vextract.low.u32 %v1300
      %v1302 = vextract.high.u32 %v1300
      %v1303 = vmul.u32 %v1296, %v1287
      %v1304 = vadd.s32 %v1299, %v1301
      %vm1305 = vc.u32 %v1299, %v1301
      %v1306 = vadd.s32 %v1302, 1
      %v1307 = vsel %vm1305, %v1306, %v1302
      %v1308 = vadd.s32 %v1303, %v1307
      %v1309 = vadd.s32 %v1308, 536870912
      %v1310 = vshrl.u32 %v1309, 30
      %v1311 = vshll.u32 %v1310, 30
      %v1312 = vsub.s32 %v1308, %v1311
      %vm1313 = vcmp.lt.s32.totalorder %v1312, 0
      %v1314 = vsub.s32 0, %v1312
      %v1315 = vsel %vm1313, %v1314, %v1312
      %v1316 = vclz %v1315
      %v1317 = vsub.s32 %v1316, 2
      %vm1318 = vcmp.gt.s32.totalorder 0, %v1317
      %v1319 = vsel %vm1318, 0, %v1317
      %v1320 = vsub.s32 32, %v1319
      %v1321 = vshll.u32 %v1312, %v1319
      %v1322 = vshrl.u32 %v1304, %v1320
      %v1323 = vor.u32 %v1321, %v1322
      %v1324 = vsub.s32 4294967266, %v1319
      %v1325 = vadd.s32 %v1324, 127
      %v1326 = vshll.u32 %v1325, 23
      %v1327 = vor.u32 4788187, %v1326
      %v1328 = vand.u32 2147483647, %v1327
      %v1330 = vcvt.s32.f32 %v1323
      %v1331 = vmul.f32 %v1330, %v1328
      %v1332 = vxor.u32 %v1331, 2147483648
      %v1333 = vsel %vm1250, %v1332, %v1331
      %v1334 = vsub.s32 4, %v1310
      %v1335 = vsel %vm1250, %v1334, %v1310
      %v1336 = vsel %vm1249, %v622, %v1333
      %v1337 = vsel %vm1249, 0, %v1335
      %v1338 = vcosq.f32.pop %v1336
      %v1339 = vsinq.f32.pop %v1336
      %vm1340 = vweird.f32 %v622
      %v1341 = vadd.s32 %v1337, 3
      %v1342 = vand.u32 %v1341, 3
      %vm1343 = vcmp.lt.s32.totalorder %v1342, 2
      %vm1344 = vcmp.eq.s32.totalorder %v1342, 0
      %v1345 = vxor.u32 %v1339, 2147483648
      %v1346 = vsel %vm1344, %v1338, %v1345
      %vm1347 = vcmp.eq.s32.totalorder %v1342, 2
      %v1348 = vxor.u32 %v1338, 2147483648
      %v1349 = vsel %vm1347, %v1348, %v1339
      %v1350 = vsel %vm1343, %v1346, %v1349
      %v1351 = vsel %vm1340, nan, %v1350
      %v1352 = vand.u32 2147483647, %v623
      %vm1353 = vcmp.le.f32.partialorder %v1352, 0.7853982
      %vm1354 = vcmp.lt.s32.totalorder %v623, 0
      %v1355 = vand.u32 %v623, 2139095040
      %v1356 = vshrl.u32 %v1355, 23
      %v1357 = vsub.s32 %v1356, 127
      %v1358 = vand.u32 2147483647, %v623
      %v1359 = vand.u32 %v1358, 8388607
      %v1360 = vor.u32 %v1359, 8388608
      %v1361 = vsub.s32 0, %v1360
      %v1362 = vadd.s32 %v1357, 1
      %vm1363 = vcmp.gt.s32.totalorder %v1362, 0
      %v1364 = vsel %vm1363, %v1362, 0
      %v1365 = vshrl.u32 %v1364, 5
      %v1366 = vand.u32 %v1364, 31
      %v1367 = vsub.s32 32, %v1366
      %v1368 = vshrl.u32 683565275, %v1367
      %v1369 = vshll.u32 683565275, %v1366
      %v1370 = vshrl.u32 2475754826, %v1367
      %v1371 = vor.u32 %v1369, %v1370
      %v1372 = vshll.u32 2475754826, %v1366
      %v1373 = vshrl.u32 2131351028, %v1367
      %v1374 = vor.u32 %v1372, %v1373
      %v1375 = vshll.u32 2131351028, %v1366
      %v1376 = vshrl.u32 2102212464, %v1367
      %v1377 = vor.u32 %v1375, %v1376
      %v1378 = vshll.u32 2102212464, %v1366
      %v1379 = vshrl.u32 920167782, %v1367
      %v1380 = vor.u32 %v1378, %v1379
      %v1381 = vshll.u32 920167782, %v1366
      %v1382 = vshrl.u32 1326507024, %v1367
      %v1383 = vor.u32 %v1381, %v1382
      %vm1384 = vcmp.lt.s32.totalorder %v1365, 1
      %vm1385 = vcmp.lt.s32.totalorder %v1365, 2
      %vm1386 = vcmp.lt.s32.totalorder %v1365, 3
      %vm1387 = vcmp.lt.s32.totalorder %v1365, 4
      %v1388 = vsel %vm1384, %v1368, %v1371
      %v1389 = vsel %vm1387, %v1377, 2102212464
      %v1390 = vsel %vm1386, %v1374, %v1389
      %v1391 = vsel %vm1385, %v1388, %v1390
      %v1392 = vsel %vm1384, %v1371, %v1374
      %v1393 = vsel %vm1387, %v1380, 920167782
      %v1394 = vsel %vm1386, %v1377, %v1393
      %v1395 = vsel %vm1385, %v1392, %v1394
      %v1396 = vsel %vm1384, %v1374, %v1377
      %v1397 = vsel %vm1387, %v1383, 1326507024
      %v1398 = vsel %vm1386, %v1380, %v1397
      %v1399 = vsel %vm1385, %v1396, %v1398
      %v1400 = vshll.u32 %v1360, 8
      %v1401 = vmul.u32.u64.compose %v1400, %v1399
      %v1402 = vextract.low.u32 %v1401
      %v1403 = vextract.high.u32 %v1401
      %v1404 = vmul.u32.u64.compose %v1400, %v1395
      %v1405 = vextract.low.u32 %v1404
      %v1406 = vextract.high.u32 %v1404
      %v1407 = vmul.u32 %v1400, %v1391
      %v1408 = vadd.s32 %v1403, %v1405
      %vm1409 = vc.u32 %v1403, %v1405
      %v1410 = vadd.s32 %v1406, 1
      %v1411 = vsel %vm1409, %v1410, %v1406
      %v1412 = vadd.s32 %v1407, %v1411
      %v1413 = vadd.s32 %v1412, 536870912
      %v1414 = vshrl.u32 %v1413, 30
      %v1415 = vshll.u32 %v1414, 30
      %v1416 = vsub.s32 %v1412, %v1415
      %vm1417 = vcmp.lt.s32.totalorder %v1416, 0
      %v1418 = vsub.s32 0, %v1416
      %v1419 = vsel %vm1417, %v1418, %v1416
      %v1420 = vclz %v1419
      %v1421 = vsub.s32 %v1420, 2
      %vm1422 = vcmp.gt.s32.totalorder 0, %v1421
      %v1423 = vsel %vm1422, 0, %v1421
      %v1424 = vsub.s32 32, %v1423
      %v1425 = vshll.u32 %v1416, %v1423
      %v1426 = vshrl.u32 %v1408, %v1424
      %v1427 = vor.u32 %v1425, %v1426
      %v1428 = vsub.s32 4294967266, %v1423
      %v1429 = vadd.s32 %v1428, 127
      %v1430 = vshll.u32 %v1429, 23
      %v1431 = vor.u32 4788187, %v1430
      %v1432 = vand.u32 2147483647, %v1431
      %v1434 = vcvt.s32.f32 %v1427
      %v1435 = vmul.f32 %v1434, %v1432
      %v1436 = vxor.u32 %v1435, 2147483648
      %v1437 = vsel %vm1354, %v1436, %v1435
      %v1438 = vsub.s32 4, %v1414
      %v1439 = vsel %vm1354, %v1438, %v1414
      %v1440 = vsel %vm1353, %v623, %v1437
      %v1441 = vsel %vm1353, 0, %v1439
      %v1442 = vcosq.f32.pop %v1440
      %v1443 = vsinq.f32.pop %v1440
      %vm1444 = vweird.f32 %v623
      %v1445 = vadd.s32 %v1441, 3
      %v1446 = vand.u32 %v1445, 3
      %vm1447 = vcmp.lt.s32.totalorder %v1446, 2
      %vm1448 = vcmp.eq.s32.totalorder %v1446, 0
      %v1449 = vxor.u32 %v1443, 2147483648
      %v1450 = vsel %vm1448, %v1442, %v1449
      %vm1451 = vcmp.eq.s32.totalorder %v1446, 2
      %v1452 = vxor.u32 %v1442, 2147483648
      %v1453 = vsel %vm1451, %v1452, %v1443
      %v1454 = vsel %vm1447, %v1450, %v1453
      %v1455 = vsel %vm1444, nan, %v1454
      %v1456 = vadd.f32 %v592, %v727
      %v1457 = vadd.f32 %v593, %v831
      %v1458 = vadd.f32 %v594, %v935
      %v1459 = vadd.f32 %v595, %v1039
      %v1460 = vadd.f32 %v596, %v1143
      %v1461 = vadd.f32 %v597, %v1247
      %v1462 = vadd.f32 %v598, %v1351
      %v1463 = vadd.f32 %v599, %v1455
      %v1464 = vpack.c.bf16 %v1457, %v1456
      %v1465 = vpack.c.bf16 %v1459, %v1458
      %v1466 = vpack.c.bf16 %v1461, %v1460
      %v1467 = vpack.c.bf16 %v1463, %v1462
      %v1468 = vld [vmem:[%s1] sm:$0xff]
      %v1469 = vld [vmem:[%s1 + $0x8] sm:$0xff]
      %v1470 = vld [vmem:[%s1 + $0x10] sm:$0xff]
      %v1471 = vld [vmem:[%s1 + $0x18] sm:$0xff]
      %v1472 = vld [vmem:[%s1 + $0x20] sm:$0xff]
      %v1473 = vld [vmem:[%s1 + $0x28] sm:$0xff]
      %v1474 = vld [vmem:[%s1 + $0x30] sm:$0xff]
      %v1475 = vld [vmem:[%s1 + $0x38] sm:$0xff]
      %v1476 = vld [vmem:[%s1 + $0x40] sm:$0xff]
      %v1477 = vld [vmem:[%s1 + $0x48] sm:$0xff]
      %v1478 = vld [vmem:[%s1 + $0x50] sm:$0xff]
      %v1479 = vld [vmem:[%s1 + $0x58] sm:$0xff]
      %v1480 = vld [vmem:[%s1 + $0x60] sm:$0xff]
      %v1481 = vld [vmem:[%s1 + $0x68] sm:$0xff]
      %v1482 = vld [vmem:[%s1 + $0x70] sm:$0xff]
      %v1483 = vld [vmem:[%s1 + $0x78] sm:$0xff]
      %v1500 = vunpack.c.l.b16 %v1468
      %v1501 = vunpack.c.h.b16 %v1468
      %v1502 = vunpack.c.l.b16 %v1469
      %v1503 = vunpack.c.h.b16 %v1469
      %v1504 = vunpack.c.l.b16 %v1470
      %v1505 = vunpack.c.h.b16 %v1470
      %v1506 = vunpack.c.l.b16 %v1471
      %v1507 = vunpack.c.h.b16 %v1471
      %v1508 = vunpack.c.l.b16 %v1472
      %v1509 = vunpack.c.h.b16 %v1472
      %v1510 = vunpack.c.l.b16 %v1473
      %v1511 = vunpack.c.h.b16 %v1473
      %v1512 = vunpack.c.l.b16 %v1474
      %v1513 = vunpack.c.h.b16 %v1474
      %v1514 = vunpack.c.l.b16 %v1475
      %v1515 = vunpack.c.h.b16 %v1475
      %v1516 = vunpack.c.l.b16 %v1476
      %v1517 = vunpack.c.h.b16 %v1476
      %v1518 = vunpack.c.l.b16 %v1477
      %v1519 = vunpack.c.h.b16 %v1477
      %v1520 = vunpack.c.l.b16 %v1478
      %v1521 = vunpack.c.h.b16 %v1478
      %v1522 = vunpack.c.l.b16 %v1479
      %v1523 = vunpack.c.h.b16 %v1479
      %v1524 = vunpack.c.l.b16 %v1480
      %v1525 = vunpack.c.h.b16 %v1480
      %v1526 = vunpack.c.l.b16 %v1481
      %v1527 = vunpack.c.h.b16 %v1481
      %v1528 = vunpack.c.l.b16 %v1482
      %v1529 = vunpack.c.h.b16 %v1482
      %v1530 = vunpack.c.l.b16 %v1483
      %v1531 = vunpack.c.h.b16 %v1483
      %v1532 = vpack.c.b16 %v1502, %v1500
      %v1533 = vpack.c.b16 %v1503, %v1501
      %v1534 = vpack.c.b16 %v1506, %v1504
      %v1535 = vpack.c.b16 %v1507, %v1505
      %v1536 = vpack.c.b16 %v1510, %v1508
      %v1537 = vpack.c.b16 %v1511, %v1509
      %v1538 = vpack.c.b16 %v1514, %v1512
      %v1539 = vpack.c.b16 %v1515, %v1513
      %v1540 = vpack.c.b16 %v1518, %v1516
      %v1541 = vpack.c.b16 %v1519, %v1517
      %v1542 = vpack.c.b16 %v1522, %v1520
      %v1543 = vpack.c.b16 %v1523, %v1521
      %v1544 = vpack.c.b16 %v1526, %v1524
      %v1545 = vpack.c.b16 %v1527, %v1525
      %v1546 = vpack.c.b16 %v1530, %v1528
      %v1547 = vpack.c.b16 %v1531, %v1529
      %1564 = vmatprep.subr.bf16.mxu0 %v1547
      %1565 = vmatpush1.bf16.msra.mxu0 %v1546
      %1566 = vmatprep.subr.bf16.mxu0 %v1545
      %1567 = vmatpush1.bf16.msra.mxu0 %v1544
      %1568 = vmatprep.subr.bf16.mxu0 %v1543
      %1569 = vmatpush1.bf16.msra.mxu0 %v1542
      %1570 = vmatprep.subr.bf16.mxu0 %v1541
      %1571 = vmatpush1.bf16.msra.mxu0 %v1540
      %1572 = vmatprep.subr.bf16.mxu0 %v1539
      %1573 = vmatpush1.bf16.msra.mxu0 %v1538
      %1574 = vmatprep.subr.bf16.mxu0 %v1537
      %1575 = vmatpush1.bf16.msra.mxu0 %v1536
      %1576 = vmatprep.subr.bf16.mxu0 %v1535
      %1577 = vmatpush1.bf16.msra.mxu0 %v1534
      %1578 = vmatprep.subr.bf16.mxu0 %v1533
      %1579 = vmatpush1.bf16.msra.mxu0 %v1532
      %1580 = vmatprep.subr.bf16.mxu0 0
      %1581 = vmatpush2.bf16.msra.mxu0 0
      %1582 = vmatprep.subr.bf16.mxu0 0
      %1583 = vmatpush2.bf16.msra.mxu0 0
      %1584 = vmatprep.subr.bf16.mxu0 0
      %1585 = vmatpush2.bf16.msra.mxu0 0
      %1586 = vmatprep.subr.bf16.mxu0 0
      %1587 = vmatpush2.bf16.msra.mxu0 0
      %1588 = vmatprep.subr.bf16.mxu0 0
      %1589 = vmatpush2.bf16.msra.mxu0 0
      %1590 = vmatprep.subr.bf16.mxu0 0
      %1591 = vmatpush2.bf16.msra.mxu0 0
      %1592 = vmatprep.subr.bf16.mxu0 0
      %1593 = vmatpush2.bf16.msra.mxu0 0
      %1594 = vmatprep.subr.bf16.mxu0 0
      %1595 = vmatpush2.bf16.msra.mxu0 0
      %1596 = vmatprep.mubr.bf16.mxu0 0
      %1597 = vmatmul.mubr.bf16.gmra.mxu0 %v1464
      %v1598 = vpop.f32.mrf.mxu0
      %v1599 = vadd.f32 0.0, %v1598
      %v1600 = vpop.f32.mrf.mxu0
      %v1601 = vadd.f32 0.0, %v1600
      %v1602 = vpop.f32.mrf.mxu0
      %v1603 = vadd.f32 0.0, %v1602
      %v1604 = vpop.f32.mrf.mxu0
      %v1605 = vadd.f32 0.0, %v1604
      %1606 = vmatprep.mubr.bf16.mxu0 0
      %1607 = vmatmul.mubr.bf16.gmra.mxu0 %v1465
      %v1608 = vpop.f32.mrf.mxu0
      %v1609 = vadd.f32 0.0, %v1608
      %v1610 = vpop.f32.mrf.mxu0
      %v1611 = vadd.f32 0.0, %v1610
      %v1612 = vpop.f32.mrf.mxu0
      %v1613 = vadd.f32 0.0, %v1612
      %v1614 = vpop.f32.mrf.mxu0
      %v1615 = vadd.f32 0.0, %v1614
      %1616 = vmatprep.mubr.bf16.mxu0 0
      %1617 = vmatmul.mubr.bf16.gmra.mxu0 %v1466
      %v1618 = vpop.f32.mrf.mxu0
      %v1619 = vadd.f32 0.0, %v1618
      %v1620 = vpop.f32.mrf.mxu0
      %v1621 = vadd.f32 0.0, %v1620
      %v1622 = vpop.f32.mrf.mxu0
      %v1623 = vadd.f32 0.0, %v1622
      %v1624 = vpop.f32.mrf.mxu0
      %v1625 = vadd.f32 0.0, %v1624
      %1626 = vmatprep.mubr.bf16.mxu0 0
      %1627 = vmatmul.mubr.bf16.gmra.mxu0 %v1467
      %v1628 = vpop.f32.mrf.mxu0
      %v1629 = vadd.f32 0.0, %v1628
      %v1630 = vpop.f32.mrf.mxu0
      %v1631 = vadd.f32 0.0, %v1630
      %v1632 = vpop.f32.mrf.mxu0
      %v1633 = vadd.f32 0.0, %v1632
      %v1634 = vpop.f32.mrf.mxu0
      %v1635 = vadd.f32 0.0, %v1634
      %1636 = vdwg.mxu0
      %v1637 = vlaneseq
      %v1638 = vshrl.u32 %v1637, 7
      %v1639 = vsub.s32 3, %v1638
      %v1640 = vrot.slane %v305, %v1639
      %v1641 = vadd.f32 %v1599, %v1640
      %v1642 = vadd.f32 %v1603, %v1640
      %v1643 = vadd.f32 %v1609, %v1640
      %v1644 = vadd.f32 %v1613, %v1640
      %v1645 = vadd.f32 %v1619, %v1640
      %v1646 = vadd.f32 %v1623, %v1640
      %v1647 = vadd.f32 %v1629, %v1640
      %v1648 = vadd.f32 %v1633, %v1640
      %v1649 = vmax.f32 %v1641, 0.0
      %v1650 = vmax.f32 %v1642, 0.0
      %v1651 = vmax.f32 %v1643, 0.0
      %v1652 = vmax.f32 %v1644, 0.0
      %v1653 = vmax.f32 %v1645, 0.0
      %v1654 = vmax.f32 %v1646, 0.0
      %v1655 = vmax.f32 %v1647, 0.0
      %v1656 = vmax.f32 %v1648, 0.0
      %v1657 = vpack.c.bf16 %v1650, %v1649
      %v1658 = vpack.c.bf16 %v1652, %v1651
      %v1659 = vpack.c.bf16 %v1654, %v1653
      %v1660 = vpack.c.bf16 %v1656, %v1655
      %v1661 = vld [vmem:[%s2] sm:$0xf]
      %v1662 = vld [vmem:[%s2 + $0x4] sm:$0xf]
      %v1663 = vld [vmem:[%s2 + $0x8] sm:$0xf]
      %v1664 = vld [vmem:[%s2 + $0xc] sm:$0xf]
      %v1665 = vld [vmem:[%s2 + $0x10] sm:$0xf]
      %v1666 = vld [vmem:[%s2 + $0x14] sm:$0xf]
      %v1667 = vld [vmem:[%s2 + $0x18] sm:$0xf]
      %v1668 = vld [vmem:[%s2 + $0x1c] sm:$0xf]
      %v1669 = vld [vmem:[%s2 + $0x20] sm:$0xf]
      %v1670 = vld [vmem:[%s2 + $0x24] sm:$0xf]
      %v1671 = vld [vmem:[%s2 + $0x28] sm:$0xf]
      %v1672 = vld [vmem:[%s2 + $0x2c] sm:$0xf]
      %v1673 = vld [vmem:[%s2 + $0x30] sm:$0xf]
      %v1674 = vld [vmem:[%s2 + $0x34] sm:$0xf]
      %v1675 = vld [vmem:[%s2 + $0x38] sm:$0xf]
      %v1676 = vld [vmem:[%s2 + $0x3c] sm:$0xf]
      %v1677 = vlaneseq
      %v1678 = vshrl.u32 %v1677, 7
      %v1679 = vsub.s32 4, %v1678
      %v1680 = vrot.slane %v305, %v1679
      %v1697 = vunpack.c.l.b16 %v1661
      %v1698 = vunpack.c.l.b16 %v1662
      %v1699 = vunpack.c.l.b16 %v1663
      %v1700 = vunpack.c.l.b16 %v1664
      %v1701 = vunpack.c.l.b16 %v1665
      %v1702 = vunpack.c.l.b16 %v1666
      %v1703 = vunpack.c.l.b16 %v1667
      %v1704 = vunpack.c.l.b16 %v1668
      %v1705 = vunpack.c.l.b16 %v1669
      %v1706 = vunpack.c.l.b16 %v1670
      %v1707 = vunpack.c.l.b16 %v1671
      %v1708 = vunpack.c.l.b16 %v1672
      %v1709 = vunpack.c.l.b16 %v1673
      %v1710 = vunpack.c.l.b16 %v1674
      %v1711 = vunpack.c.l.b16 %v1675
      %v1712 = vunpack.c.l.b16 %v1676
      %v1713 = vpack.c.b16 %v1698, %v1697
      %v1714 = vpack.c.b16 %v1700, %v1699
      %v1715 = vpack.c.b16 %v1702, %v1701
      %v1716 = vpack.c.b16 %v1704, %v1703
      %v1717 = vpack.c.b16 %v1706, %v1705
      %v1718 = vpack.c.b16 %v1708, %v1707
      %v1719 = vpack.c.b16 %v1710, %v1709
      %v1720 = vpack.c.b16 %v1712, %v1711
      %1729 = vmatprep.subr.bf16.mxu0 0
      %1730 = vmatpush1.bf16.msra.mxu0 %v1720
      %1731 = vmatprep.subr.bf16.mxu0 0
      %1732 = vmatpush1.bf16.msra.mxu0 %v1719
      %1733 = vmatprep.subr.bf16.mxu0 0
      %1734 = vmatpush1.bf16.msra.mxu0 %v1718
      %1735 = vmatprep.subr.bf16.mxu0 0
      %1736 = vmatpush1.bf16.msra.mxu0 %v1717
      %1737 = vmatprep.subr.bf16.mxu0 0
      %1738 = vmatpush1.bf16.msra.mxu0 %v1716
      %1739 = vmatprep.subr.bf16.mxu0 0
      %1740 = vmatpush1.bf16.msra.mxu0 %v1715
      %1741 = vmatprep.subr.bf16.mxu0 0
      %1742 = vmatpush1.bf16.msra.mxu0 %v1714
      %1743 = vmatprep.subr.bf16.mxu0 0
      %1744 = vmatpush1.bf16.msra.mxu0 %v1713
      %1745 = vmatprep.subr.bf16.mxu0 0
      %1746 = vmatpush2.bf16.msra.mxu0 0
      %1747 = vmatprep.subr.bf16.mxu0 0
      %1748 = vmatpush2.bf16.msra.mxu0 0
      %1749 = vmatprep.subr.bf16.mxu0 0
      %1750 = vmatpush2.bf16.msra.mxu0 0
      %1751 = vmatprep.subr.bf16.mxu0 0
      %1752 = vmatpush2.bf16.msra.mxu0 0
      %1753 = vmatprep.subr.bf16.mxu0 0
      %1754 = vmatpush2.bf16.msra.mxu0 0
      %1755 = vmatprep.subr.bf16.mxu0 0
      %1756 = vmatpush2.bf16.msra.mxu0 0
      %1757 = vmatprep.subr.bf16.mxu0 0
      %1758 = vmatpush2.bf16.msra.mxu0 0
      %1759 = vmatprep.subr.bf16.mxu0 0
      %1760 = vmatpush2.bf16.msra.mxu0 0
      %1761 = vmatprep.mubr.bf16.mxu0 0
      %1762 = vmatmul.mubr.bf16.gmra.mxu0 %v1657
      %v1763 = vpop.f32.mrf.mxu0
      %v1764 = vadd.f32 %v1680, %v1763
      %v1765 = vpop.f32.mrf.mxu0
      %v1766 = vpop.f32.mrf.mxu0
      %v1767 = vadd.f32 %v1680, %v1766
      %v1768 = vpop.f32.mrf.mxu0
      %1769 = vmatprep.mubr.bf16.mxu0 0
      %1770 = vmatmul.mubr.bf16.gmra.mxu0 %v1658
      %v1771 = vpop.f32.mrf.mxu0
      %v1772 = vadd.f32 %v1680, %v1771
      %v1773 = vpop.f32.mrf.mxu0
      %v1774 = vpop.f32.mrf.mxu0
      %v1775 = vadd.f32 %v1680, %v1774
      %v1776 = vpop.f32.mrf.mxu0
      %1777 = vmatprep.mubr.bf16.mxu0 0
      %1778 = vmatmul.mubr.bf16.gmra.mxu0 %v1659
      %v1779 = vpop.f32.mrf.mxu0
      %v1780 = vadd.f32 %v1680, %v1779
      %v1781 = vpop.f32.mrf.mxu0
      %v1782 = vpop.f32.mrf.mxu0
      %v1783 = vadd.f32 %v1680, %v1782
      %v1784 = vpop.f32.mrf.mxu0
      %1785 = vmatprep.mubr.bf16.mxu0 0
      %1786 = vmatmul.mubr.bf16.gmra.mxu0 %v1660
      %v1787 = vpop.f32.mrf.mxu0
      %v1788 = vadd.f32 %v1680, %v1787
      %v1789 = vpop.f32.mrf.mxu0
      %v1790 = vpop.f32.mrf.mxu0
      %v1791 = vadd.f32 %v1680, %v1790
      %v1792 = vpop.f32.mrf.mxu0
      %1793 = vdwg.mxu0
      %v1794 = vmax.f32 %v1764, 0.0
      %v1795 = vmax.f32 %v1767, 0.0
      %v1796 = vmax.f32 %v1772, 0.0
      %v1797 = vmax.f32 %v1775, 0.0
      %v1798 = vmax.f32 %v1780, 0.0
      %v1799 = vmax.f32 %v1783, 0.0
      %v1800 = vmax.f32 %v1788, 0.0
      %v1801 = vmax.f32 %v1791, 0.0
      %v1802 = vpack.c.bf16 %v1795, %v1794
      %v1803 = vpack.c.bf16 %v1797, %v1796
      %v1804 = vpack.c.bf16 %v1799, %v1798
      %v1805 = vpack.c.bf16 %v1801, %v1800
      %v1806 = vld [vmem:[%s3] sm:$0xf]
      %v1807 = vld [vmem:[%s3 + $0x4] sm:$0xf]
      %v1808 = vld [vmem:[%s3 + $0x8] sm:$0xf]
      %v1809 = vld [vmem:[%s3 + $0xc] sm:$0xf]
      %v1810 = vld [vmem:[%s3 + $0x10] sm:$0xf]
      %v1811 = vld [vmem:[%s3 + $0x14] sm:$0xf]
      %v1812 = vld [vmem:[%s3 + $0x18] sm:$0xf]
      %v1813 = vld [vmem:[%s3 + $0x1c] sm:$0xf]
      %v1814 = vld [vmem:[%s3 + $0x20] sm:$0xf]
      %v1815 = vld [vmem:[%s3 + $0x24] sm:$0xf]
      %v1816 = vld [vmem:[%s3 + $0x28] sm:$0xf]
      %v1817 = vld [vmem:[%s3 + $0x2c] sm:$0xf]
      %v1818 = vld [vmem:[%s3 + $0x30] sm:$0xf]
      %v1819 = vld [vmem:[%s3 + $0x34] sm:$0xf]
      %v1820 = vld [vmem:[%s3 + $0x38] sm:$0xf]
      %v1821 = vld [vmem:[%s3 + $0x3c] sm:$0xf]
      %v1838 = vunpack.c.l.b16 %v1806
      %v1839 = vunpack.c.l.b16 %v1807
      %v1840 = vunpack.c.l.b16 %v1808
      %v1841 = vunpack.c.l.b16 %v1809
      %v1842 = vunpack.c.l.b16 %v1810
      %v1843 = vunpack.c.l.b16 %v1811
      %v1844 = vunpack.c.l.b16 %v1812
      %v1845 = vunpack.c.l.b16 %v1813
      %v1846 = vunpack.c.l.b16 %v1814
      %v1847 = vunpack.c.l.b16 %v1815
      %v1848 = vunpack.c.l.b16 %v1816
      %v1849 = vunpack.c.l.b16 %v1817
      %v1850 = vunpack.c.l.b16 %v1818
      %v1851 = vunpack.c.l.b16 %v1819
      %v1852 = vunpack.c.l.b16 %v1820
      %v1853 = vunpack.c.l.b16 %v1821
      %v1854 = vpack.c.b16 %v1839, %v1838
      %v1855 = vpack.c.b16 %v1841, %v1840
      %v1856 = vpack.c.b16 %v1843, %v1842
      %v1857 = vpack.c.b16 %v1845, %v1844
      %v1858 = vpack.c.b16 %v1847, %v1846
      %v1859 = vpack.c.b16 %v1849, %v1848
      %v1860 = vpack.c.b16 %v1851, %v1850
      %v1861 = vpack.c.b16 %v1853, %v1852
      %1870 = vmatprep.subr.bf16.mxu0 0
      %1871 = vmatpush1.bf16.msra.mxu0 %v1861
      %1872 = vmatprep.subr.bf16.mxu0 0
      %1873 = vmatpush1.bf16.msra.mxu0 %v1860
      %1874 = vmatprep.subr.bf16.mxu0 0
      %1875 = vmatpush1.bf16.msra.mxu0 %v1859
      %1876 = vmatprep.subr.bf16.mxu0 0
      %1877 = vmatpush1.bf16.msra.mxu0 %v1858
      %1878 = vmatprep.subr.bf16.mxu0 0
      %1879 = vmatpush1.bf16.msra.mxu0 %v1857
      %1880 = vmatprep.subr.bf16.mxu0 0
      %1881 = vmatpush1.bf16.msra.mxu0 %v1856
      %1882 = vmatprep.subr.bf16.mxu0 0
      %1883 = vmatpush1.bf16.msra.mxu0 %v1855
      %1884 = vmatprep.subr.bf16.mxu0 0
      %1885 = vmatpush1.bf16.msra.mxu0 %v1854
      %1886 = vmatprep.subr.bf16.mxu0 0
      %1887 = vmatpush2.bf16.msra.mxu0 0
      %1888 = vmatprep.subr.bf16.mxu0 0
      %1889 = vmatpush2.bf16.msra.mxu0 0
      %1890 = vmatprep.subr.bf16.mxu0 0
      %1891 = vmatpush2.bf16.msra.mxu0 0
      %1892 = vmatprep.subr.bf16.mxu0 0
      %1893 = vmatpush2.bf16.msra.mxu0 0
      %1894 = vmatprep.subr.bf16.mxu0 0
      %1895 = vmatpush2.bf16.msra.mxu0 0
      %1896 = vmatprep.subr.bf16.mxu0 0
      %1897 = vmatpush2.bf16.msra.mxu0 0
      %1898 = vmatprep.subr.bf16.mxu0 0
      %1899 = vmatpush2.bf16.msra.mxu0 0
      %1900 = vmatprep.subr.bf16.mxu0 0
      %1901 = vmatpush2.bf16.msra.mxu0 0
      %1902 = vmatprep.mubr.bf16.mxu0 0
      %1903 = vmatmul.mubr.bf16.gmra.mxu0 %v1802
      %v1904 = vpop.f32.mrf.mxu0
      %v1905 = vadd.f32 %v1601, %v1904
      %v1906 = vpop.f32.mrf.mxu0
      %v1907 = vpop.f32.mrf.mxu0
      %v1908 = vadd.f32 %v1605, %v1907
      %v1909 = vpop.f32.mrf.mxu0
      %1910 = vmatprep.mubr.bf16.mxu0 0
      %1911 = vmatmul.mubr.bf16.gmra.mxu0 %v1803
      %v1912 = vpop.f32.mrf.mxu0
      %v1913 = vadd.f32 %v1611, %v1912
      %v1914 = vpop.f32.mrf.mxu0
      %v1915 = vpop.f32.mrf.mxu0
      %v1916 = vadd.f32 %v1615, %v1915
      %v1917 = vpop.f32.mrf.mxu0
      %1918 = vmatprep.mubr.bf16.mxu0 0
      %1919 = vmatmul.mubr.bf16.gmra.mxu0 %v1804
      %v1920 = vpop.f32.mrf.mxu0
      %v1921 = vadd.f32 %v1621, %v1920
      %v1922 = vpop.f32.mrf.mxu0
      %v1923 = vpop.f32.mrf.mxu0
      %v1924 = vadd.f32 %v1625, %v1923
      %v1925 = vpop.f32.mrf.mxu0
      %1926 = vmatprep.mubr.bf16.mxu0 0
      %1927 = vmatmul.mubr.bf16.gmra.mxu0 %v1805
      %v1928 = vpop.f32.mrf.mxu0
      %v1929 = vadd.f32 %v1631, %v1928
      %v1930 = vpop.f32.mrf.mxu0
      %v1931 = vpop.f32.mrf.mxu0
      %v1932 = vadd.f32 %v1635, %v1931
      %v1933 = vpop.f32.mrf.mxu0
      %1934 = vdwg.mxu0
      %v1935 = vlaneseq
      %v1936 = vshrl.u32 %v1935, 7
      %v1937 = vsub.s32 5, %v1936
      %v1938 = vrot.slane %v305, %v1937
      %v1939 = vadd.f32 %v1905, %v1938
      %v1940 = vadd.f32 %v1908, %v1938
      %v1941 = vadd.f32 %v1913, %v1938
      %v1942 = vadd.f32 %v1916, %v1938
      %v1943 = vadd.f32 %v1921, %v1938
      %v1944 = vadd.f32 %v1924, %v1938
      %v1945 = vadd.f32 %v1929, %v1938
      %v1946 = vadd.f32 %v1932, %v1938
      %v1947 = vmax.f32 %v1939, 0.0
      %v1948 = vmax.f32 %v1940, 0.0
      %v1949 = vmax.f32 %v1941, 0.0
      %v1950 = vmax.f32 %v1942, 0.0
      %v1951 = vmax.f32 %v1943, 0.0
      %v1952 = vmax.f32 %v1944, 0.0
      %v1953 = vmax.f32 %v1945, 0.0
      %v1954 = vmax.f32 %v1946, 0.0
      %v1955 = vpack.c.bf16 %v1948, %v1947
      %v1956 = vpack.c.bf16 %v1950, %v1949
      %v1957 = vpack.c.bf16 %v1952, %v1951
      %v1958 = vpack.c.bf16 %v1954, %v1953
      %v1959 = vld [vmem:[%s4] sm:$0xff]
      %v1960 = vld [vmem:[%s4 + $0x8] sm:$0xff]
      %v1961 = vld [vmem:[%s4 + $0x10] sm:$0xff]
      %v1962 = vld [vmem:[%s4 + $0x18] sm:$0xff]
      %v1963 = vld [vmem:[%s4 + $0x20] sm:$0xff]
      %v1964 = vld [vmem:[%s4 + $0x28] sm:$0xff]
      %v1965 = vld [vmem:[%s4 + $0x30] sm:$0xff]
      %v1966 = vld [vmem:[%s4 + $0x38] sm:$0xff]
      %v1967 = vld [vmem:[%s4 + $0x40] sm:$0xff]
      %v1968 = vld [vmem:[%s4 + $0x48] sm:$0xff]
      %v1969 = vld [vmem:[%s4 + $0x50] sm:$0xff]
      %v1970 = vld [vmem:[%s4 + $0x58] sm:$0xff]
      %v1971 = vld [vmem:[%s4 + $0x60] sm:$0xff]
      %v1972 = vld [vmem:[%s4 + $0x68] sm:$0xff]
      %v1973 = vld [vmem:[%s4 + $0x70] sm:$0xff]
      %v1974 = vld [vmem:[%s4 + $0x78] sm:$0xff]
      %v1975 = vlaneseq
      %v1976 = vshrl.u32 %v1975, 7
      %v1977 = vsub.s32 6, %v1976
      %v1978 = vrot.slane %v305, %v1977
      %v1979 = vlaneseq
      %v1980 = vshrl.u32 %v1979, 7
      %v1981 = vsub.s32 6, %v1980
      %v1982 = vrot.slane %v306, %v1981
      %v1999 = vunpack.c.l.b16 %v1959
      %v2000 = vunpack.c.h.b16 %v1959
      %v2001 = vunpack.c.l.b16 %v1960
      %v2002 = vunpack.c.h.b16 %v1960
      %v2003 = vunpack.c.l.b16 %v1961
      %v2004 = vunpack.c.h.b16 %v1961
      %v2005 = vunpack.c.l.b16 %v1962
      %v2006 = vunpack.c.h.b16 %v1962
      %v2007 = vunpack.c.l.b16 %v1963
      %v2008 = vunpack.c.h.b16 %v1963
      %v2009 = vunpack.c.l.b16 %v1964
      %v2010 = vunpack.c.h.b16 %v1964
      %v2011 = vunpack.c.l.b16 %v1965
      %v2012 = vunpack.c.h.b16 %v1965
      %v2013 = vunpack.c.l.b16 %v1966
      %v2014 = vunpack.c.h.b16 %v1966
      %v2015 = vunpack.c.l.b16 %v1967
      %v2016 = vunpack.c.h.b16 %v1967
      %v2017 = vunpack.c.l.b16 %v1968
      %v2018 = vunpack.c.h.b16 %v1968
      %v2019 = vunpack.c.l.b16 %v1969
      %v2020 = vunpack.c.h.b16 %v1969
      %v2021 = vunpack.c.l.b16 %v1970
      %v2022 = vunpack.c.h.b16 %v1970
      %v2023 = vunpack.c.l.b16 %v1971
      %v2024 = vunpack.c.h.b16 %v1971
      %v2025 = vunpack.c.l.b16 %v1972
      %v2026 = vunpack.c.h.b16 %v1972
      %v2027 = vunpack.c.l.b16 %v1973
      %v2028 = vunpack.c.h.b16 %v1973
      %v2029 = vunpack.c.l.b16 %v1974
      %v2030 = vunpack.c.h.b16 %v1974
      %v2031 = vpack.c.b16 %v2001, %v1999
      %v2032 = vpack.c.b16 %v2002, %v2000
      %v2033 = vpack.c.b16 %v2005, %v2003
      %v2034 = vpack.c.b16 %v2006, %v2004
      %v2035 = vpack.c.b16 %v2009, %v2007
      %v2036 = vpack.c.b16 %v2010, %v2008
      %v2037 = vpack.c.b16 %v2013, %v2011
      %v2038 = vpack.c.b16 %v2014, %v2012
      %v2039 = vpack.c.b16 %v2017, %v2015
      %v2040 = vpack.c.b16 %v2018, %v2016
      %v2041 = vpack.c.b16 %v2021, %v2019
      %v2042 = vpack.c.b16 %v2022, %v2020
      %v2043 = vpack.c.b16 %v2025, %v2023
      %v2044 = vpack.c.b16 %v2026, %v2024
      %v2045 = vpack.c.b16 %v2029, %v2027
      %v2046 = vpack.c.b16 %v2030, %v2028
      %2063 = vmatprep.subr.bf16.mxu0 %v2046
      %2064 = vmatpush1.bf16.msra.mxu0 %v2045
      %2065 = vmatprep.subr.bf16.mxu0 %v2044
      %2066 = vmatpush1.bf16.msra.mxu0 %v2043
      %2067 = vmatprep.subr.bf16.mxu0 %v2042
      %2068 = vmatpush1.bf16.msra.mxu0 %v2041
      %2069 = vmatprep.subr.bf16.mxu0 %v2040
      %2070 = vmatpush1.bf16.msra.mxu0 %v2039
      %2071 = vmatprep.subr.bf16.mxu0 %v2038
      %2072 = vmatpush1.bf16.msra.mxu0 %v2037
      %2073 = vmatprep.subr.bf16.mxu0 %v2036
      %2074 = vmatpush1.bf16.msra.mxu0 %v2035
      %2075 = vmatprep.subr.bf16.mxu0 %v2034
      %2076 = vmatpush1.bf16.msra.mxu0 %v2033
      %2077 = vmatprep.subr.bf16.mxu0 %v2032
      %2078 = vmatpush1.bf16.msra.mxu0 %v2031
      %2079 = vmatprep.subr.bf16.mxu0 0
      %2080 = vmatpush2.bf16.msra.mxu0 0
      %2081 = vmatprep.subr.bf16.mxu0 0
      %2082 = vmatpush2.bf16.msra.mxu0 0
      %2083 = vmatprep.subr.bf16.mxu0 0
      %2084 = vmatpush2.bf16.msra.mxu0 0
      %2085 = vmatprep.subr.bf16.mxu0 0
      %2086 = vmatpush2.bf16.msra.mxu0 0
      %2087 = vmatprep.subr.bf16.mxu0 0
      %2088 = vmatpush2.bf16.msra.mxu0 0
      %2089 = vmatprep.subr.bf16.mxu0 0
      %2090 = vmatpush2.bf16.msra.mxu0 0
      %2091 = vmatprep.subr.bf16.mxu0 0
      %2092 = vmatpush2.bf16.msra.mxu0 0
      %2093 = vmatprep.subr.bf16.mxu0 0
      %2094 = vmatpush2.bf16.msra.mxu0 0
      %2095 = vmatprep.mubr.bf16.mxu0 0
      %2096 = vmatmul.mubr.bf16.gmra.mxu0 %v1955
      %v2097 = vpop.f32.mrf.mxu0
      %v2098 = vadd.f32 %v1978, %v2097
      %v2099 = vpop.f32.mrf.mxu0
      %v2100 = vadd.f32 %v1982, %v2099
      %v2101 = vpop.f32.mrf.mxu0
      %v2102 = vadd.f32 %v1978, %v2101
      %v2103 = vpop.f32.mrf.mxu0
      %v2104 = vadd.f32 %v1982, %v2103
      %2105 = vmatprep.mubr.bf16.mxu0 0
      %2106 = vmatmul.mubr.bf16.gmra.mxu0 %v1956
      %v2107 = vpop.f32.mrf.mxu0
      %v2108 = vadd.f32 %v1978, %v2107
      %v2109 = vpop.f32.mrf.mxu0
      %v2110 = vadd.f32 %v1982, %v2109
      %v2111 = vpop.f32.mrf.mxu0
      %v2112 = vadd.f32 %v1978, %v2111
      %v2113 = vpop.f32.mrf.mxu0
      %v2114 = vadd.f32 %v1982, %v2113
      %2115 = vmatprep.mubr.bf16.mxu0 0
      %2116 = vmatmul.mubr.bf16.gmra.mxu0 %v1957
      %v2117 = vpop.f32.mrf.mxu0
      %v2118 = vadd.f32 %v1978, %v2117
      %v2119 = vpop.f32.mrf.mxu0
      %v2120 = vadd.f32 %v1982, %v2119
      %v2121 = vpop.f32.mrf.mxu0
      %v2122 = vadd.f32 %v1978, %v2121
      %v2123 = vpop.f32.mrf.mxu0
      %v2124 = vadd.f32 %v1982, %v2123
      %2125 = vmatprep.mubr.bf16.mxu0 0
      %2126 = vmatmul.mubr.bf16.gmra.mxu0 %v1958
      %v2127 = vpop.f32.mrf.mxu0
      %v2128 = vadd.f32 %v1978, %v2127
      %v2129 = vpop.f32.mrf.mxu0
      %v2130 = vadd.f32 %v1982, %v2129
      %v2131 = vpop.f32.mrf.mxu0
      %v2132 = vadd.f32 %v1978, %v2131
      %v2133 = vpop.f32.mrf.mxu0
      %v2134 = vadd.f32 %v1982, %v2133
      %2135 = vdwg.mxu0
      %2136 = vst [vmem:[%s288] sm:$0xff] %v2098
      %2137 = vst [vmem:[%s288 + $0x8] sm:$0xff] %v2102
      %2138 = vst [vmem:[%s288 + $0x10] sm:$0xff] %v2108
      %2139 = vst [vmem:[%s288 + $0x18] sm:$0xff] %v2112
      %2140 = vst [vmem:[%s288 + $0x20] sm:$0xff] %v2118
      %2141 = vst [vmem:[%s288 + $0x28] sm:$0xff] %v2122
      %2142 = vst [vmem:[%s288 + $0x30] sm:$0xff] %v2128
      %2143 = vst [vmem:[%s288 + $0x38] sm:$0xff] %v2132
      %vm2144 = vcmask 130048
      %2145 = vst.msk [vmem:[%s294] sm:$0xff] %vm2144, %v2100
      %2146 = vst.msk [vmem:[%s294 + $0x8] sm:$0xff] %vm2144, %v2104
      %2147 = vst.msk [vmem:[%s294 + $0x10] sm:$0xff] %vm2144, %v2110
      %2148 = vst.msk [vmem:[%s294 + $0x18] sm:$0xff] %vm2144, %v2114
      %2149 = vst.msk [vmem:[%s294 + $0x20] sm:$0xff] %vm2144, %v2120
      %2150 = vst.msk [vmem:[%s294 + $0x28] sm:$0xff] %vm2144, %v2124
      %2151 = vst.msk [vmem:[%s294 + $0x30] sm:$0xff] %vm2144, %v2130
      %2152 = vst.msk [vmem:[%s294 + $0x38] sm:$0xff] %vm2144, %v2134
      %s2153 = smul.u32 8, %s19
      %p2154 = scmp.lt.s32.totalorder %s2153, 31
      %s2155 = scalar_select %p2154, %s2153, 31
      %s2156 = smul.addr %s2155, 8
      %s2157 = scalar_lea.vmem %s6, %s2156
      %s2158 = smul.u32 8, %s19
      %p2159 = scmp.lt.s32.totalorder %s2158, 31
      %s2160 = scalar_select %p2159, %s2158, 31
      %s2161 = smul.addr %s2160, 8
      %s2162 = scalar_lea.vmem %s7, %s2161
      // Predicated region
      $region45: #{nerf_mlp_forward.1} parent=43 // pred_check
        %p2163 = pneg %p168
      $region46: #{nerf_mlp_forward.1} parent=43 // pred_check_branch
        %2165 = sbr.rel (%p2163) target = $region48
      $region47: #{nerf_mlp_forward.1} parent=43 // pred_region
        %s2166 = smul.u32 8, %s19
      $region48: #{nerf_mlp_forward.1} parent=43 // pred_fallthru
        _
      // Predicated region
      $region49: #{nerf_mlp_forward.1} parent=43 // pred_check
        %p2167 = pneg %p194
      $region50: #{nerf_mlp_forward.1} parent=43 // pred_check_branch
        %2169 = sbr.rel (%p2167) target = $region52
      $region51: #{nerf_mlp_forward.1} parent=43 // pred_region
        %s2170 = smul.u32 8, %s19
      $region52: #{nerf_mlp_forward.1} parent=43 // pred_fallthru
        _
    $region44: #{nerf_mlp_forward.1} parent=5 // pred_fallthru
      _
    %p2171 = scmp.le.s32.totalorder 2, %s14
    // Predicated region
    $region53: #{nerf_mlp_forward.1} parent=5 // pred_check
      %p2172 = pneg %p2171
    $region54: #{nerf_mlp_forward.1} parent=5 // pred_check_branch
      %2174 = sbr.rel (%p2172) target = $region56
    $region55: #{nerf_mlp_forward.1} parent=5 // pred_region
      %s2175 = ssub.s32 %s14, 2
      // Predicated region
      $region57: #{nerf_mlp_forward.1} parent=55 // pred_check
        %p2176 = pneg %p174
      $region58: #{nerf_mlp_forward.1} parent=55 // pred_check_branch
        %2178 = sbr.rel (%p2176) target = $region60
      $region59: #{nerf_mlp_forward.1} parent=55 // pred_region
        %s2179 = smul.u32 8, %s20
        %p2180 = scmp.lt.s32.totalorder %s2179, 31
        %s2181 = scalar_select %p2180, %s2179, 31
        %s2182 = smul.addr %s2181, 8
        %s2183 = scalar_lea.vmem %s6, %s2182
      $region60: #{nerf_mlp_forward.1} parent=55 // pred_fallthru
        _
      // Predicated region
      $region61: #{nerf_mlp_forward.1} parent=55 // pred_check
        %p2184 = pneg %p200
      $region62: #{nerf_mlp_forward.1} parent=55 // pred_check_branch
        %2186 = sbr.rel (%p2184) target = $region64
      $region63: #{nerf_mlp_forward.1} parent=55 // pred_region
        %s2187 = smul.u32 8, %s20
        %p2188 = scmp.lt.s32.totalorder %s2187, 31
        %s2189 = scalar_select %p2188, %s2187, 31
        %s2190 = smul.addr %s2189, 8
        %s2191 = scalar_lea.vmem %s7, %s2190
      $region64: #{nerf_mlp_forward.1} parent=55 // pred_fallthru
        _
    $region56: #{nerf_mlp_forward.1} parent=5 // pred_fallthru
      _
  $region6: #{nerf_mlp_forward.1} parent=0 // loop_footer
    %s18 = sadd.s32 1, %s14
  $region7: #{nerf_mlp_forward.1} parent=0 // loop_footer_branch
    %13 = sbr.rel target = $region3
  $region8: #{nerf_mlp_forward.1} parent=0 // loop_exit
    _

</llo_original>
